<compile_context>
chip_gen: v5e
topology: v5e:2x2
jax: 0.10.0
libtpu: 0.0.40
codegen_flags: <defaults>
</compile_context>

<pallas_src>
import functools

import jax
import jax.numpy as jnp
from jax import lax
from jax.experimental import pallas as pl
from jax.experimental.pallas import tpu as pltpu


def _cdiv(a: int, b: int) -> int:
    return -(-a // b)


def _round_up(x: int, m: int) -> int:
    return _cdiv(x, m) * m


# ---------------------------------------------------------------------------
# Kernels
# ---------------------------------------------------------------------------
def _linear_kernel(x_ref, w_ref, o_ref, acc_ref, *, precision):
    # x_ref: (TM, TK), w_ref: (TK, TN)  (weight already (in, out) in HBM)
    # o_ref: (TM, TN), acc_ref: (TM, TN) f32 scratch persisting over the K axis
    @pl.when(pl.program_id(2) == 0)
    def _():
        acc_ref[...] = jnp.zeros_like(acc_ref)

    acc_ref[...] += jnp.dot(
        x_ref[...], w_ref[...],
        preferred_element_type=jnp.float32,
        precision=precision,
    )

    @pl.when(pl.program_id(2) == pl.num_programs(2) - 1)
    def _():
        o_ref[...] = acc_ref[...].astype(o_ref.dtype)


def _linear_residual_kernel(x_ref, w_ref, xres_ref, o_ref, acc_ref, *, precision):
    @pl.when(pl.program_id(2) == 0)
    def _():
        acc_ref[...] = jnp.zeros_like(acc_ref)

    acc_ref[...] += jnp.dot(
        x_ref[...], w_ref[...],
        preferred_element_type=jnp.float32,
        precision=precision,
    )

    @pl.when(pl.program_id(2) == pl.num_programs(2) - 1)
    def _():
        o_ref[...] = (acc_ref[...] + xres_ref[...].astype(jnp.float32)
                      ).astype(o_ref.dtype)


# ---------------------------------------------------------------------------
# Tile selection
# ---------------------------------------------------------------------------
def _choose_tiles(B: int, din: int, dout: int):
    # N tile (lane axis): multiple of 128, minimal padded columns.
    if dout <= 256:
        tn = _round_up(dout, 128)
    elif dout % 256 == 0:
        tn = 256
    elif dout % 128 == 0:
        tn = 128            # e.g. dout=384 -> exact fit, no padded MXU passes
    else:
        tn = min(256, _round_up(_cdiv(dout, _cdiv(dout, 256)), 128))
    num_n = _cdiv(dout, tn)

    # M tile: target ~512 rows, multiple of 8, minimal tail waste; guarantee
    # >= 2 grid cells when feasible so both v7x TensorCores get work.
    num_m = max(1, _cdiv(B, 512))
    if num_m * num_n < 2 and B >= 16:
        num_m = 2
    tm = _round_up(_cdiv(B, num_m), 8)
    num_m = _cdiv(B, tm)

    # K tile: full feature dim, or an exact 128-multiple divisor of it, so the
    # contraction never sees a partial (garbage-padded) K block.
    if din <= 1024 or din % 128 != 0:
        tk = din
    else:
        tk = next(c for c in (1024, 512, 256, 128) if din % c == 0)
    num_k = max(1, din // tk)

    return tm, tn, tk, num_m, num_n, num_k


# ---------------------------------------------------------------------------
# Wrapper
# ---------------------------------------------------------------------------
def one_layer_nn_forward(x, weight, residual=False, *, precision=None):
    """Forward pass of One_Layer_NN.

    x: (..., input_dim); weight: (output_dim, input_dim) (PyTorch layout).
    precision: lax.Precision for the matmul. None -> fast default MXU path;
    lax.Precision.HIGHEST reproduces PyTorch f32 numerics.
    """
    *lead, din = x.shape
    dout, din_w = weight.shape
    assert din == din_w, "weight must have shape (output_dim, input_dim)"
    if residual:
        assert din == dout, "residual connection requires input_dim == output_dim"

    x2d = x.reshape(-1, din)
    B = x2d.shape[0]

    # Tiny problems: pallas_call fixed overhead dominates -> let XLA fuse it.
    if B * din * dout < (1 << 20):
        res = lax.dot_general(x2d, weight,
                              dimension_numbers=(((1,), (1,)), ((), ())),
                              precision=precision)
        out2d = res + x2d if residual else res
        return out2d.reshape(*lead, dout)

    tm, tn, tk, num_m, num_n, num_k = _choose_tiles(B, din, dout)

    # One-time transpose of the small weight to (K, N): the in-kernel dot then
    # needs no transpose of the pinned weight tile.
    w_t = weight.T  # (din, dout)

    # Grid order: pin whichever operand has more HBM traffic at stake on the
    # slow axis (its block index is constant across the fast axis, so it is
    # fetched from HBM only once when num_k == 1).
    x_bytes, w_bytes = B * din, dout * din
    traffic_x_outer = x_bytes + num_m * w_bytes     # x pinned, w streamed
    traffic_w_outer = w_bytes + num_n * x_bytes     # w pinned, x streamed
    x_outer = traffic_x_outer <= traffic_w_outer

    if x_outer:
        grid = (num_m, num_n, num_k)
        x_spec = pl.BlockSpec((tm, tk), lambda i, j, k: (i, k))
        w_spec = pl.BlockSpec((tk, tn), lambda i, j, k: (k, j))
        o_spec = pl.BlockSpec((tm, tn), lambda i, j, k: (i, j))
        r_spec = pl.BlockSpec((tm, tn), lambda i, j, k: (i, j))
    else:
        grid = (num_n, num_m, num_k)
        x_spec = pl.BlockSpec((tm, tk), lambda j, i, k: (i, k))
        w_spec = pl.BlockSpec((tk, tn), lambda j, i, k: (k, j))
        o_spec = pl.BlockSpec((tm, tn), lambda j, i, k: (i, j))
        r_spec = pl.BlockSpec((tm, tn), lambda j, i, k: (i, j))

    if residual:
        kernel = functools.partial(_linear_residual_kernel, precision=precision)
        in_specs = [x_spec, w_spec, r_spec]
        operands = (x2d, w_t, x2d)
    else:
        kernel = functools.partial(_linear_kernel, precision=precision)
        in_specs = [x_spec, w_spec]
        operands = (x2d, w_t)

    itemsize = x.dtype.itemsize
    # Bytes actually streamed by the chosen schedule (advisory for XLA).
    if num_k == 1:
        x_reads, w_reads = (1, num_m) if x_outer else (num_n, 1)
    else:
        x_reads, w_reads = num_n, num_m
    bytes_accessed = itemsize * (x_reads * x_bytes + w_reads * w_bytes
                                 + B * dout * (2 if residual else 1))
    cost = pl.CostEstimate(flops=2 * B * din * dout, transcendentals=0,
                           bytes_accessed=int(bytes_accessed))

    # Double-buffered input/output blocks + f32 accumulator, with headroom.
    blk_bytes = itemsize * (tm * tk + tk * tn + tm * tn * (2 if residual else 1))
    need = 2 * blk_bytes + 4 * tm * tn
    vmem_limit = int(min(max(2 * need + (8 << 20), 32 << 20), 64 << 20))

    out2d = pl.pallas_call(
        kernel,
        out_shape=jax.ShapeDtypeStruct((B, dout), x.dtype),
        grid_spec=pltpu.PrefetchScalarGridSpec(
            num_scalar_prefetch=0,
            grid=grid,
            in_specs=in_specs,
            out_specs=o_spec,
            scratch_shapes=[pltpu.VMEM((tm, tn), jnp.float32)],
        ),
        compiler_params=pltpu.CompilerParams(
            dimension_semantics=("parallel", "parallel", "arbitrary"),
            vmem_limit_bytes=vmem_limit,
        ),
        cost_estimate=cost,
    )(*operands)

    return out2d.reshape(*lead, dout)


# ---------------------------------------------------------------------------
# Demo / self-check
# ---------------------------------------------------------------------------
if __name__ == "__main__":
    key = jax.random.PRNGKey(0)
    ks = jax.random.split(key, 8)
    HI = lax.Precision.HIGHEST

    # 1) Small shape typical of the module (hits the fused-XLA fallback).
    B, din, dout = 8, 32, 32
    x = jax.random.normal(ks[0], (B, din), dtype=jnp.float32)
    w = jax.random.normal(ks[1], (dout, din), dtype=jnp.float32) * 0.1
    out = jax.block_until_ready(one_layer_nn_forward(x, w, residual=False, precision=HI))
    ref = jnp.matmul(x, w.T, precision=HI)
    assert jnp.allclose(out, ref, atol=1e-4, rtol=1e-4), "mismatch (small, residual=False)"
    out_r = jax.block_until_ready(one_layer_nn_forward(x, w, residual=True, precision=HI))
    assert jnp.allclose(out_r, ref + x, atol=1e-4, rtol=1e-4), "mismatch (small, residual=True)"

    # 2) Multi-tile Pallas path: ragged batch, K not a multiple of 128, tn=128.
    B2, din2, dout2 = 300, 96, 384
    x2 = jax.random.normal(ks[2], (B2, din2), dtype=jnp.float32)
    w2 = jax.random.normal(ks[3], (dout2, din2), dtype=jnp.float32) * 0.05
    out2 = jax.block_until_ready(one_layer_nn_forward(x2, w2, precision=HI))
    ref2 = jnp.matmul(x2, w2.T, precision=HI)
    assert jnp.allclose(out2, ref2, atol=1e-3, rtol=1e-3), "mismatch (multi-tile)"

    # 3) Multi-tile residual (fused residual add across column tiles).
    B3, d3 = 300, 384
    x3 = jax.random.normal(ks[4], (B3, d3), dtype=jnp.float32)
    w3 = jax.random.normal(ks[5], (d3, d3), dtype=jnp.float32) * 0.05
    out3 = jax.block_until_ready(one_layer_nn_forward(x3, w3, residual=True, precision=HI))
    ref3 = jnp.matmul(x3, w3.T, precision=HI) + x3
    assert jnp.allclose(out3, ref3, atol=1e-3, rtol=1e-3), "mismatch (multi-tile residual)"

    # 4) Large ensemble/batch, default (fast MXU) precision, weight-pinned order.
    B4, din4, dout4 = 1024, 256, 128
    x4 = jax.random.normal(ks[6], (B4, din4), dtype=jnp.float32)
    w4 = jax.random.normal(ks[7], (dout4, din4), dtype=jnp.float32) * 0.05
    out4 = jax.block_until_ready(one_layer_nn_forward(x4, w4))
    ref4 = jnp.matmul(x4, w4.T, precision=HI)
    assert jnp.allclose(out4, ref4, atol=5e-2, rtol=5e-2), "mismatch (default precision)"

    print("KERNEL_OK")
</pallas_src>

<mosaic_0001>
module attributes {stable_mosaic.version = 11 : i64} {
  func.func @_linear_kernel(%arg0: i32, %arg1: i32, %arg2: i32, %arg3: memref<304x96xf32, #tpu.memory_space<vmem>>, %arg4: memref<96x128xf32, #tpu.memory_space<vmem>>, %arg5: memref<304x128xf32, #tpu.memory_space<vmem>>, %arg6: memref<304x128xf32, #tpu.memory_space<vmem>>) attributes {dimension_semantics = [#tpu.dimension_semantics<parallel>, #tpu.dimension_semantics<parallel>, #tpu.dimension_semantics<arbitrary>], iteration_bounds = array<i64: 1, 3, 1>, scalar_prefetch = 0 : i64, scratch_operands = 1 : i64, tpu.core_type = #tpu.core_type<tc>, window_params = [{transform_indices = @transform_0, window_bounds = array<i64: 304, 96>}, {transform_indices = @transform_1, window_bounds = array<i64: 96, 128>}, {transform_indices = @transform_2, window_bounds = array<i64: 304, 128>}]} {
    %c0_i32 = arith.constant 0 : i32
    %0 = arith.cmpi eq, %arg2, %c0_i32 : i32
    %1 = arith.extui %0 : i1 to i32
    %c0_i32_0 = arith.constant 0 : i32
    %2 = arith.cmpi ne, %1, %c0_i32_0 : i32
    scf.if %2 {
      %cst_10 = arith.constant 0.000000e+00 : f32
      %12 = vector.broadcast %cst_10 : f32 to vector<304x128xf32>
      %c0_11 = arith.constant 0 : index
      %c0_12 = arith.constant 0 : index
      %13 = vector.load %arg6[%c0_11, %c0_12] : memref<304x128xf32, #tpu.memory_space<vmem>>, vector<304x128xf32>
      tpu.vector_store %arg6[%c0_11, %c0_12], %12 {strides = array<i32>} : memref<304x128xf32, #tpu.memory_space<vmem>>, vector<304x128xf32>,
    } else {
    }
    %c0 = arith.constant 0 : index
    %c0_1 = arith.constant 0 : index
    %3 = vector.load %arg6[%c0, %c0_1] : memref<304x128xf32, #tpu.memory_space<vmem>>, vector<304x128xf32>
    %c0_2 = arith.constant 0 : index
    %c0_3 = arith.constant 0 : index
    %4 = vector.load %arg3[%c0_2, %c0_3] : memref<304x96xf32, #tpu.memory_space<vmem>>, vector<304x96xf32>
    %c0_4 = arith.constant 0 : index
    %c0_5 = arith.constant 0 : index
    %5 = vector.load %arg4[%c0_4, %c0_5] : memref<96x128xf32, #tpu.memory_space<vmem>>, vector<96x128xf32>
    %cst = arith.constant dense<0.000000e+00> : vector<304x128xf32>
    %6 = tpu.matmul %4, %5, %cst {dimension_numbers = #tpu.dot_dimension_numbers<[1], [0], [0], [1], [0, 0, 1, 1], [], []>, precision = #tpu.contract_precision<fp32>} : vector<304x96xf32>, vector<96x128xf32>, vector<304x128xf32> -> vector<304x128xf32>
    %7 = arith.addf %3, %6 : vector<304x128xf32>
    %c0_6 = arith.constant 0 : index
    %c0_7 = arith.constant 0 : index
    %8 = vector.load %arg6[%c0_6, %c0_7] : memref<304x128xf32, #tpu.memory_space<vmem>>, vector<304x128xf32>
    tpu.vector_store %arg6[%c0_6, %c0_7], %7 {strides = array<i32>} : memref<304x128xf32, #tpu.memory_space<vmem>>, vector<304x128xf32>,
    %c0_i32_8 = arith.constant 0 : i32
    %9 = arith.cmpi eq, %arg2, %c0_i32_8 : i32
    %10 = arith.extui %9 : i1 to i32
    %c0_i32_9 = arith.constant 0 : i32
    %11 = arith.cmpi ne, %10, %c0_i32_9 : i32
    scf.if %11 {
      %c0_10 = arith.constant 0 : index
      %c0_11 = arith.constant 0 : index
      %12 = vector.load %arg6[%c0_10, %c0_11] : memref<304x128xf32, #tpu.memory_space<vmem>>, vector<304x128xf32>
      %c0_12 = arith.constant 0 : index
      %c0_13 = arith.constant 0 : index
      %13 = vector.load %arg5[%c0_12, %c0_13] : memref<304x128xf32, #tpu.memory_space<vmem>>, vector<304x128xf32>
      tpu.vector_store %arg5[%c0_12, %c0_13], %12 {strides = array<i32>} : memref<304x128xf32, #tpu.memory_space<vmem>>, vector<304x128xf32>,
    } else {
    }
    return
  }
  func.func @transform_0(%arg0: i32, %arg1: i32, %arg2: i32) -> (i32, i32) {
    %c0_i32 = arith.constant 0 : i32
    return %arg0, %arg2 : i32, i32
  }
  func.func @transform_1(%arg0: i32, %arg1: i32, %arg2: i32) -> (i32, i32) {
    %c0_i32 = arith.constant 0 : i32
    return %arg2, %arg1 : i32, i32
  }
  func.func @transform_2(%arg0: i32, %arg1: i32, %arg2: i32) -> (i32, i32) {
    %c0_i32 = arith.constant 0 : i32
    return %arg0, %arg1 : i32, i32
  }
}

</mosaic_0001>

<llo_original>
// kernel: tpu_custom_call.1
$region0: #{tpu_custom_call.1}
  #allocation0 [shape = 'u32[]', space=smem, size = 0x4, offset = 0x4, fixed_abs, tag = 'smem constant byte address 0x4 - core index']
  #allocation1 [shape = 'u32[72,128]{1,0:T(1,128)}', space=vmem, size = 0x9000, scoped, tag = 'internal scratch']
  #allocation2 [shape = 'f32[304,128]{1,0:T(8,128)}', space=vmem, size = 0x26000, scoped, tag = 'scratch operand']
  %s0 = inlined_call_operand.vmem [shape: f32[300,96], index: 0, kind: input, shape index: {}]
  %s1 = inlined_call_operand.vmem [shape: f32[96,384], index: 1, kind: input, shape index: {}]
  %s2 = inlined_call_operand.hbm [shape: f32[300,384], index: 2, kind: output, shape index: {}]
  %s3 = sld [smem:[#allocation0]]
  $region87: #{tpu_custom_call.1} parent=0
    _
  %s5 = ssub.s32 1, %s3
  %s6 = scalar_select 0, %s5, %s3
  $region1: #{tpu_custom_call.1} parent=0
    #allocation3 [shape = 'u8[98304]{0}', space=vmem, size = 0x18000, scoped, tag = 'input window, operand 1']
    #allocation4 [shape = 'u8[311296]{0}', space=vmem, size = 0x4c000, scoped, tag = 'output window, operand 0']
    #allocation5 [shape = 's32[2]{0}', space=sflag, size = 0x8, scoped, tag = 'scoped memory for tpu_custom_call.1']
    %7 = vsyncpa [#allocation5], 0
    %s8 = scalar_lea.sflag [#allocation5], 1
    %9 = vsyncpa %s8, 0
    loop: start=0, step=1, limit=5
    $region2: #{tpu_custom_call.1} parent=1 // loop_pre_header
      _
    $region3: #{tpu_custom_call.1} parent=1 // loop_header
      %s11 = sphi 0, %s15
      %p12 = scmp.ge.s32.totalorder %s11, 5
      %s18 = sphi 0, %s37
      %s19 = sphi 0, %s33
      %s20 = sphi 0, %s29
      %s21 = sphi 0, %s18
      %s22 = sphi 0, %s19
      %s23 = sphi 0, %s20
      %s24 = sphi 0, %s21
      %s25 = sphi 0, %s22
      %s26 = sphi 0, %s23
      %s42 = sphi 0, %s44
      %s45 = sphi 0, %s42
      %s46 = sphi 0, %s45
      %s62 = sphi 0, %s46
      %s70 = sphi 0, %s72
      %s73 = sphi 0, %s70
      %s74 = sphi 0, %s73
      %s90 = sphi 0, %s74
      %s98 = sphi 0, %s100
      %s101 = sphi 0, %s98
      %s102 = sphi 0, %s101
      %s118 = sphi 0, %s102
    $region4: #{tpu_custom_call.1} parent=1 // loop_header_branch
      %14 = sbr.rel (%p12) target = $region8
    $region5: #{tpu_custom_call.1} parent=1 // loop_body
      %s16 = ssub.s32 %s11, 1
      %s17 = ssub.s32 %s11, 2
      %s27 = sadd.s32 1, %s20
      %p28 = scmp.ge.s32.totalorder %s27, 1
      %s29 = scalar_select %p28, 0, %s27
      %s30 = sadd.s32 1, %s19
      %s31 = scalar_select %p28, %s30, %s19
      %p32 = scmp.ge.s32.totalorder %s31, 3
      %s33 = scalar_select %p32, 0, %s31
      %s34 = sadd.s32 1, %s18
      %s35 = scalar_select %p32, %s34, %s18
      %p36 = scmp.ge.s32.totalorder %s35, 1
      %s37 = scalar_select %p36, 0, %s35
      %s38 = ssub.s32 %s18, %s37
      %s39 = ssub.s32 %s20, %s29
      %s40 = sor.u32 %s38, %s39
      %p41 = scmp.eq.s32.totalorder %s40, 0
      %s43 = sadd.s32 %s42, 1
      %s44 = scalar_select %p41, %s42, %s43
      %p47 = pneg %p41
      %p48 = scmp.eq.s32.totalorder %s11, 2
      %p49 = por %p47, %p48
      %p50 = scmp.ne.s32.totalorder %s42, %s45
      %p51 = scmp.eq.s32.totalorder %s11, 0
      %p52 = por %p50, %p51
      %p53 = scmp.ne.s32.totalorder %s42, %s45
      %p54 = scmp.eq.s32.totalorder %s16, 2
      %p55 = por %p53, %p54
      %p56 = scmp.ne.s32.totalorder %s45, %s46
      %p57 = scmp.eq.s32.totalorder %s16, 0
      %p58 = por %p56, %p57
      %p59 = scmp.ne.s32.totalorder %s45, %s46
      %p60 = scmp.eq.s32.totalorder %s17, 2
      %p61 = por %p59, %p60
      %p63 = scmp.ne.s32.totalorder %s46, %s62
      %p64 = scmp.eq.s32.totalorder %s17, 0
      %p65 = por %p63, %p64
      %s66 = ssub.s32 %s20, %s29
      %s67 = ssub.s32 %s19, %s33
      %s68 = sor.u32 %s66, %s67
      %p69 = scmp.eq.s32.totalorder %s68, 0
      %s71 = sadd.s32 %s70, 1
      %s72 = scalar_select %p69, %s70, %s71
      %p75 = pneg %p69
      %p76 = scmp.eq.s32.totalorder %s11, 2
      %p77 = por %p75, %p76
      %p78 = scmp.ne.s32.totalorder %s70, %s73
      %p79 = scmp.eq.s32.totalorder %s11, 0
      %p80 = por %p78, %p79
      %p81 = scmp.ne.s32.totalorder %s70, %s73
      %p82 = scmp.eq.s32.totalorder %s16, 2
      %p83 = por %p81, %p82
      %p84 = scmp.ne.s32.totalorder %s73, %s74
      %p85 = scmp.eq.s32.totalorder %s16, 0
      %p86 = por %p84, %p85
      %p87 = scmp.ne.s32.totalorder %s73, %s74
      %p88 = scmp.eq.s32.totalorder %s17, 2
      %p89 = por %p87, %p88
      %p91 = scmp.ne.s32.totalorder %s74, %s90
      %p92 = scmp.eq.s32.totalorder %s17, 0
      %p93 = por %p91, %p92
      %s94 = ssub.s32 %s18, %s37
      %s95 = ssub.s32 %s19, %s33
      %s96 = sor.u32 %s94, %s95
      %p97 = scmp.eq.s32.totalorder %s96, 0
      %s99 = sadd.s32 %s98, 1
      %s100 = scalar_select %p97, %s98, %s99
      %p103 = pneg %p97
      %p104 = scmp.eq.s32.totalorder %s11, 2
      %p105 = por %p103, %p104
      %p106 = scmp.ne.s32.totalorder %s98, %s101
      %p107 = scmp.eq.s32.totalorder %s11, 0
      %p108 = por %p106, %p107
      %p109 = scmp.ne.s32.totalorder %s98, %s101
      %p110 = scmp.eq.s32.totalorder %s16, 2
      %p111 = por %p109, %p110
      %p112 = scmp.ne.s32.totalorder %s101, %s102
      %p113 = scmp.eq.s32.totalorder %s16, 0
      %p114 = por %p112, %p113
      %p115 = scmp.ne.s32.totalorder %s101, %s102
      %p116 = scmp.eq.s32.totalorder %s17, 2
      %p117 = por %p115, %p116
      %p119 = scmp.ne.s32.totalorder %s102, %s118
      %p120 = scmp.eq.s32.totalorder %s17, 0
      %p121 = por %p119, %p120
      %p122 = scmp.le.s32.totalorder 1, %s11
      %p123 = scmp.lt.s32.totalorder %s11, 4
      %p124 = pnand %p122, %p123
      %p125 = pneg %p124
      // Predicated region
      $region9: #{tpu_custom_call.1} parent=5 // pred_check
        _
      $region10: #{tpu_custom_call.1} parent=5 // pred_check_branch
        %127 = sbr.rel (%p124) target = $region12
      $region11: #{tpu_custom_call.1} parent=5 // pred_region
        %s128 = ssub.s32 %s11, 1
        // Predicated region
        $region13: #{tpu_custom_call.1} parent=11 // pred_check
          %p129 = pneg %p58
        $region14: #{tpu_custom_call.1} parent=11 // pred_check_branch
          %131 = sbr.rel (%p129) target = $region16
        $region15: #{tpu_custom_call.1} parent=11 // pred_region
          %s132 = smul.u32 38, %s21
          %p133 = scmp.lt.s32.totalorder %s132, 37
          %s134 = scalar_select %p133, %s132, 37
          %p135 = scmp.lt.s32.totalorder %s23, 0
          %s136 = scalar_select %p135, %s23, 0
          %s137 = sadd.s32 %s136, %s134
          %s138 = smul.addr %s137, 8
          %s139 = scalar_lea.vmem %s0, %s138
          %s140 = smul.u32 38, %s21
        $region16: #{tpu_custom_call.1} parent=11 // pred_fallthru
          _
      $region12: #{tpu_custom_call.1} parent=5 // pred_fallthru
        _
      %p141 = scmp.lt.s32.totalorder %s11, 3
      // Predicated region
      $region17: #{tpu_custom_call.1} parent=5 // pred_check
        %p142 = pneg %p141
      $region18: #{tpu_custom_call.1} parent=5 // pred_check_branch
        %144 = sbr.rel (%p142) target = $region20
      $region19: #{tpu_custom_call.1} parent=5 // pred_region
        // Predicated region
        $region21: #{tpu_custom_call.1} parent=19 // pred_check
          %p145 = pneg %p80
        $region22: #{tpu_custom_call.1} parent=19 // pred_check_branch
          %147 = sbr.rel (%p145) target = $region24
        $region23: #{tpu_custom_call.1} parent=19 // pred_region
          %s148 = sand.u32 %s70, 1
          %s149 = sand.u32 %s70, 1
          %s150 = smul.addr %s149, 96
          %s151 = scalar_lea.vmem [#allocation3], %s150
          %s152 = smul.u32 12, %s20
          %s153 = smul.addr %s152, 3
          %s154 = sadd.s32 %s19, %s153
          %s155 = smul.addr %s154, 8
          %s156 = scalar_lea.vmem %s1, %s155
          // Predicated region
          $region25: #{tpu_custom_call.1} parent=23 // pred_check
            _
          $region26: #{tpu_custom_call.1} parent=23 // pred_check_branch
            %158 = sbr.rel (0) target = $region28
          $region27: #{tpu_custom_call.1} parent=23 // pred_region
            // Predicated region
            $region29: #{tpu_custom_call.1} parent=27 // pred_check
              _
            $region30: #{tpu_custom_call.1} parent=27 // pred_check_branch
              %160 = sbr.rel (0) target = $region32
            $region31: #{tpu_custom_call.1} parent=27 // pred_region
              // Predicated region
              $region44: #{tpu_custom_call.1} parent=31 // pred_check
                _
              $region45: #{tpu_custom_call.1} parent=31 // pred_check_branch
                %198 = sbr.rel (0) target = $region47
              $region46: #{tpu_custom_call.1} parent=31 // pred_region
                loop: start=0, step=1, limit=1
                $region48: #{tpu_custom_call.1} parent=46 // loop_pre_header
                  _
                $region49: #{tpu_custom_call.1} parent=46 // loop_header
                  %s200 = sphi 0, %s204
                  %p201 = scmp.ge.s32.totalorder %s200, 1
                  %s205 = sphi %s156, %s156
                  %s206 = sphi %s151, %s151
                $region50: #{tpu_custom_call.1} parent=46 // loop_header_branch
                  %203 = sbr.rel (%p201) target = $region54
                $region51: #{tpu_custom_call.1} parent=46 // loop_body
                  %v207 = vld [vmem:[%s205] sm:$0xff]
                  %208 = vst [vmem:[%s206] sm:$0xff] %v207
                  %v209 = vld [vmem:[%s205 + $0x18] sm:$0xff]
                  %210 = vst [vmem:[%s206 + $0x8] sm:$0xff] %v209
                  %v211 = vld [vmem:[%s205 + $0x30] sm:$0xff]
                  %212 = vst [vmem:[%s206 + $0x10] sm:$0xff] %v211
                  %v213 = vld [vmem:[%s205 + $0x48] sm:$0xff]
                  %214 = vst [vmem:[%s206 + $0x18] sm:$0xff] %v213
                  %v215 = vld [vmem:[%s205 + $0x60] sm:$0xff]
                  %216 = vst [vmem:[%s206 + $0x20] sm:$0xff] %v215
                  %v217 = vld [vmem:[%s205 + $0x78] sm:$0xff]
                  %218 = vst [vmem:[%s206 + $0x28] sm:$0xff] %v217
                  %v219 = vld [vmem:[%s205 + $0x90] sm:$0xff]
                  %220 = vst [vmem:[%s206 + $0x30] sm:$0xff] %v219
                  %v221 = vld [vmem:[%s205 + $0xa8] sm:$0xff]
                  %222 = vst [vmem:[%s206 + $0x38] sm:$0xff] %v221
                  %v223 = vld [vmem:[%s205 + $0xc0] sm:$0xff]
                  %224 = vst [vmem:[%s206 + $0x40] sm:$0xff] %v223
                  %v225 = vld [vmem:[%s205 + $0xd8] sm:$0xff]
                  %226 = vst [vmem:[%s206 + $0x48] sm:$0xff] %v225
                  %v227 = vld [vmem:[%s205 + $0xf0] sm:$0xff]
                  %228 = vst [vmem:[%s206 + $0x50] sm:$0xff] %v227
                  %v229 = vld [vmem:[%s205 + $0x108] sm:$0xff]
                  %230 = vst [vmem:[%s206 + $0x58] sm:$0xff] %v229
                $region52: #{tpu_custom_call.1} parent=46 // loop_footer
                  %s204 = sadd.s32 1, %s200
                $region53: #{tpu_custom_call.1} parent=46 // loop_footer_branch
                  %199 = sbr.rel target = $region49
                $region54: #{tpu_custom_call.1} parent=46 // loop_exit
                  _
              $region47: #{tpu_custom_call.1} parent=31 // pred_fallthru
                _
              // Predicated region
              $region55: #{tpu_custom_call.1} parent=31 // pred_check
                _
              $region56: #{tpu_custom_call.1} parent=31 // pred_check_branch
                %232 = sbr.rel target = $region58
              $region57: #{tpu_custom_call.1} parent=31 // pred_region
                _
              $region58: #{tpu_custom_call.1} parent=31 // pred_fallthru
                _
            $region32: #{tpu_custom_call.1} parent=27 // pred_fallthru
              _
            // Predicated region
            $region33: #{tpu_custom_call.1} parent=27 // pred_check
              _
            $region34: #{tpu_custom_call.1} parent=27 // pred_check_branch
              %162 = sbr.rel target = $region36
            $region35: #{tpu_custom_call.1} parent=27 // pred_region
              %s164 = ssub.s32 256, 1
              loop: start=0, step=1, limit=1
              $region37: #{tpu_custom_call.1} parent=35 // loop_pre_header
                _
              $region38: #{tpu_custom_call.1} parent=35 // loop_header
                %s166 = sphi 0, %s170
                %p167 = scmp.ge.s32.totalorder %s166, 1
                %s171 = sphi %s156, %s156
                %s172 = sphi %s151, %s151
              $region39: #{tpu_custom_call.1} parent=35 // loop_header_branch
                %169 = sbr.rel (%p167) target = $region43
              $region40: #{tpu_custom_call.1} parent=35 // loop_body
                %v173 = vld [vmem:[%s171] sm:%s164]
                %174 = vst [vmem:[%s172] sm:%s164] %v173
                %v175 = vld [vmem:[%s171 + $0x18] sm:%s164]
                %176 = vst [vmem:[%s172 + $0x8] sm:%s164] %v175
                %v177 = vld [vmem:[%s171 + $0x30] sm:%s164]
                %178 = vst [vmem:[%s172 + $0x10] sm:%s164] %v177
                %v179 = vld [vmem:[%s171 + $0x48] sm:%s164]
                %180 = vst [vmem:[%s172 + $0x18] sm:%s164] %v179
                %v181 = vld [vmem:[%s171 + $0x60] sm:%s164]
                %182 = vst [vmem:[%s172 + $0x20] sm:%s164] %v181
                %v183 = vld [vmem:[%s171 + $0x78] sm:%s164]
                %184 = vst [vmem:[%s172 + $0x28] sm:%s164] %v183
                %v185 = vld [vmem:[%s171 + $0x90] sm:%s164]
                %186 = vst [vmem:[%s172 + $0x30] sm:%s164] %v185
                %v187 = vld [vmem:[%s171 + $0xa8] sm:%s164]
                %188 = vst [vmem:[%s172 + $0x38] sm:%s164] %v187
                %v189 = vld [vmem:[%s171 + $0xc0] sm:%s164]
                %190 = vst [vmem:[%s172 + $0x40] sm:%s164] %v189
                %v191 = vld [vmem:[%s171 + $0xd8] sm:%s164]
                %192 = vst [vmem:[%s172 + $0x48] sm:%s164] %v191
                %v193 = vld [vmem:[%s171 + $0xf0] sm:%s164]
                %194 = vst [vmem:[%s172 + $0x50] sm:%s164] %v193
                %v195 = vld [vmem:[%s171 + $0x108] sm:%s164]
                %196 = vst [vmem:[%s172 + $0x58] sm:%s164] %v195
              $region41: #{tpu_custom_call.1} parent=35 // loop_footer
                %s170 = sadd.s32 1, %s166
              $region42: #{tpu_custom_call.1} parent=35 // loop_footer_branch
                %165 = sbr.rel target = $region38
              $region43: #{tpu_custom_call.1} parent=35 // loop_exit
                _
            $region36: #{tpu_custom_call.1} parent=27 // pred_fallthru
              _
          $region28: #{tpu_custom_call.1} parent=23 // pred_fallthru
            _
          %233 = vnop
        $region24: #{tpu_custom_call.1} parent=19 // pred_fallthru
          _
      $region20: #{tpu_custom_call.1} parent=5 // pred_fallthru
        _
      %p234 = scmp.le.s32.totalorder 1, %s11
      %p235 = scmp.lt.s32.totalorder %s11, 4
      %p236 = pnand %p234, %p235
      %p237 = pneg %p236
      // Predicated region
      $region59: #{tpu_custom_call.1} parent=5 // pred_check
        _
      $region60: #{tpu_custom_call.1} parent=5 // pred_check_branch
        %239 = sbr.rel (%p236) target = $region62
      $region61: #{tpu_custom_call.1} parent=5 // pred_region
        %s240 = ssub.s32 %s11, 1
        %s241 = sand.u32 %s73, 1
        %s242 = sand.u32 %s73, 1
        %s243 = smul.addr %s242, 96
        %s244 = scalar_lea.vmem [#allocation3], %s243
        // Predicated region
        $region63: #{tpu_custom_call.1} parent=61 // pred_check
          %p245 = pneg %p86
        $region64: #{tpu_custom_call.1} parent=61 // pred_check_branch
          %247 = sbr.rel (%p245) target = $region66
        $region65: #{tpu_custom_call.1} parent=61 // pred_region
          _
        $region66: #{tpu_custom_call.1} parent=61 // pred_fallthru
          _
        %s248 = smul.u32 38, %s21
        %p249 = scmp.lt.s32.totalorder %s248, 37
        %s250 = scalar_select %p249, %s248, 37
        %p251 = scmp.lt.s32.totalorder %s23, 0
        %s252 = scalar_select %p251, %s23, 0
        %s253 = sadd.s32 %s252, %s250
        %s254 = smul.addr %s253, 8
        %s255 = scalar_lea.vmem %s0, %s254
        %p256 = pneg %p58
        %p257 = pneg %p55
        %s258 = sand.u32 %s73, 1
        %s259 = sand.u32 %s73, 1
        %s260 = smul.addr %s259, 96
        %s261 = scalar_lea.vmem [#allocation3], %s260
        %p262 = pneg %p86
        %p263 = pneg %p83
        %p264 = pneg %p114
        %p265 = pneg %p111
        %s266 = sand.u32 %s101, 1
        %s267 = scalar_lea.sflag [#allocation5], %s266
        %s268 = sand.u32 %s101, 1
        %s269 = smul.addr %s268, 304
        %s270 = scalar_lea.vmem [#allocation4], %s269
        %s271 = smul.u32 38, %s21
        %p272 = scmp.lt.s32.totalorder %s271, 37
        %s273 = scalar_select %p272, %s271, 37
        %p274 = scmp.lt.s32.totalorder %s23, 0
        %s275 = scalar_select %p274, %s23, 0
        %s276 = sadd.s32 %s275, %s273
        %s277 = smul.addr %s276, 8
        %s278 = scalar_lea.vmem %s0, %s277
        %s279 = smul.u32 38, %s21
        %s280 = smul.u32 12, %s23
        %s281 = smul.u32 38, %s21
        %p282 = scmp.eq.s32.totalorder %s23, 0
        // Predicated region
        $region67: #{tpu_custom_call.1} parent=61 // pred_check
          %p283 = pneg %p282
        $region68: #{tpu_custom_call.1} parent=61 // pred_check_branch
          %285 = sbr.rel (%p283) target = $region70
        $region69: #{tpu_custom_call.1} parent=61 // pred_region
          %286 = vst [vmem:[#allocation2] sm:$0xff] 0.0
          %287 = vst [vmem:[#allocation2 + $0x8] sm:$0xff] 0.0
          %288 = vst [vmem:[#allocation2 + $0x10] sm:$0xff] 0.0
          %289 = vst [vmem:[#allocation2 + $0x18] sm:$0xff] 0.0
          %290 = vst [vmem:[#allocation2 + $0x20] sm:$0xff] 0.0
          %291 = vst [vmem:[#allocation2 + $0x28] sm:$0xff] 0.0
          %292 = vst [vmem:[#allocation2 + $0x30] sm:$0xff] 0.0
          %293 = vst [vmem:[#allocation2 + $0x38] sm:$0xff] 0.0
          %294 = vst [vmem:[#allocation2 + $0x40] sm:$0xff] 0.0
          %295 = vst [vmem:[#allocation2 + $0x48] sm:$0xff] 0.0
          %296 = vst [vmem:[#allocation2 + $0x50] sm:$0xff] 0.0
          %297 = vst [vmem:[#allocation2 + $0x58] sm:$0xff] 0.0
          %298 = vst [vmem:[#allocation2 + $0x60] sm:$0xff] 0.0
          %299 = vst [vmem:[#allocation2 + $0x68] sm:$0xff] 0.0
          %300 = vst [vmem:[#allocation2 + $0x70] sm:$0xff] 0.0
          %301 = vst [vmem:[#allocation2 + $0x78] sm:$0xff] 0.0
          %302 = vst [vmem:[#allocation2 + $0x80] sm:$0xff] 0.0
          %303 = vst [vmem:[#allocation2 + $0x88] sm:$0xff] 0.0
          %304 = vst [vmem:[#allocation2 + $0x90] sm:$0xff] 0.0
          %305 = vst [vmem:[#allocation2 + $0x98] sm:$0xff] 0.0
          %306 = vst [vmem:[#allocation2 + $0xa0] sm:$0xff] 0.0
          %307 = vst [vmem:[#allocation2 + $0xa8] sm:$0xff] 0.0
          %308 = vst [vmem:[#allocation2 + $0xb0] sm:$0xff] 0.0
          %309 = vst [vmem:[#allocation2 + $0xb8] sm:$0xff] 0.0
          %310 = vst [vmem:[#allocation2 + $0xc0] sm:$0xff] 0.0
          %311 = vst [vmem:[#allocation2 + $0xc8] sm:$0xff] 0.0
          %312 = vst [vmem:[#allocation2 + $0xd0] sm:$0xff] 0.0
          %313 = vst [vmem:[#allocation2 + $0xd8] sm:$0xff] 0.0
          %314 = vst [vmem:[#allocation2 + $0xe0] sm:$0xff] 0.0
          %315 = vst [vmem:[#allocation2 + $0xe8] sm:$0xff] 0.0
          %316 = vst [vmem:[#allocation2 + $0xf0] sm:$0xff] 0.0
          %317 = vst [vmem:[#allocation2 + $0xf8] sm:$0xff] 0.0
          %318 = vst [vmem:[#allocation2 + $0x100] sm:$0xff] 0.0
          %319 = vst [vmem:[#allocation2 + $0x108] sm:$0xff] 0.0
          %320 = vst [vmem:[#allocation2 + $0x110] sm:$0xff] 0.0
          %321 = vst [vmem:[#allocation2 + $0x118] sm:$0xff] 0.0
          %322 = vst [vmem:[#allocation2 + $0x120] sm:$0xff] 0.0
          %323 = vst [vmem:[#allocation2 + $0x128] sm:$0xff] 0.0
        $region70: #{tpu_custom_call.1} parent=61 // pred_fallthru
          _
        %v324 = vld [vmem:[#allocation2] sm:$0xff]
        %v325 = vld [vmem:[#allocation2 + $0x8] sm:$0xff]
        %v326 = vld [vmem:[#allocation2 + $0x10] sm:$0xff]
        %v327 = vld [vmem:[#allocation2 + $0x18] sm:$0xff]
        %v328 = vld [vmem:[#allocation2 + $0x20] sm:$0xff]
        %v329 = vld [vmem:[#allocation2 + $0x28] sm:$0xff]
        %v330 = vld [vmem:[#allocation2 + $0x30] sm:$0xff]
        %v331 = vld [vmem:[#allocation2 + $0x38] sm:$0xff]
        %v332 = vld [vmem:[#allocation2 + $0x40] sm:$0xff]
        %v333 = vld [vmem:[#allocation2 + $0x48] sm:$0xff]
        %v334 = vld [vmem:[#allocation2 + $0x50] sm:$0xff]
        %v335 = vld [vmem:[#allocation2 + $0x58] sm:$0xff]
        %v336 = vld [vmem:[#allocation2 + $0x60] sm:$0xff]
        %v337 = vld [vmem:[#allocation2 + $0x68] sm:$0xff]
        %v338 = vld [vmem:[#allocation2 + $0x70] sm:$0xff]
        %v339 = vld [vmem:[#allocation2 + $0x78] sm:$0xff]
        %v340 = vld [vmem:[#allocation2 + $0x80] sm:$0xff]
        %v341 = vld [vmem:[#allocation2 + $0x88] sm:$0xff]
        %v342 = vld [vmem:[#allocation2 + $0x90] sm:$0xff]
        %v343 = vld [vmem:[#allocation2 + $0x98] sm:$0xff]
        %v344 = vld [vmem:[#allocation2 + $0xa0] sm:$0xff]
        %v345 = vld [vmem:[#allocation2 + $0xa8] sm:$0xff]
        %v346 = vld [vmem:[#allocation2 + $0xb0] sm:$0xff]
        %v347 = vld [vmem:[#allocation2 + $0xb8] sm:$0xff]
        %v348 = vld [vmem:[#allocation2 + $0xc0] sm:$0xff]
        %v349 = vld [vmem:[#allocation2 + $0xc8] sm:$0xff]
        %v350 = vld [vmem:[#allocation2 + $0xd0] sm:$0xff]
        %v351 = vld [vmem:[#allocation2 + $0xd8] sm:$0xff]
        %v352 = vld [vmem:[#allocation2 + $0xe0] sm:$0xff]
        %v353 = vld [vmem:[#allocation2 + $0xe8] sm:$0xff]
        %v354 = vld [vmem:[#allocation2 + $0xf0] sm:$0xff]
        %v355 = vld [vmem:[#allocation2 + $0xf8] sm:$0xff]
        %v356 = vld [vmem:[#allocation2 + $0x100] sm:$0xff]
        %v357 = vld [vmem:[#allocation2 + $0x108] sm:$0xff]
        %v358 = vld [vmem:[#allocation2 + $0x110] sm:$0xff]
        %v359 = vld [vmem:[#allocation2 + $0x118] sm:$0xff]
        %v360 = vld [vmem:[#allocation2 + $0x120] sm:$0xff]
        %v361 = vld [vmem:[#allocation2 + $0x128] sm:$0xff]
        %v362 = vld [vmem:[%s278] sm:$0xff]
        %v363 = vld [vmem:[%s278 + $0x8] sm:$0xff]
        %v364 = vld [vmem:[%s278 + $0x10] sm:$0xff]
        %v365 = vld [vmem:[%s278 + $0x18] sm:$0xff]
        %v366 = vld [vmem:[%s278 + $0x20] sm:$0xff]
        %v367 = vld [vmem:[%s278 + $0x28] sm:$0xff]
        %v368 = vld [vmem:[%s278 + $0x30] sm:$0xff]
        %v369 = vld [vmem:[%s278 + $0x38] sm:$0xff]
        %v370 = vld [vmem:[%s278 + $0x40] sm:$0xff]
        %v371 = vld [vmem:[%s278 + $0x48] sm:$0xff]
        %v372 = vld [vmem:[%s278 + $0x50] sm:$0xff]
        %v373 = vld [vmem:[%s278 + $0x58] sm:$0xff]
        %v374 = vld [vmem:[%s278 + $0x60] sm:$0xff]
        %v375 = vld [vmem:[%s278 + $0x68] sm:$0xff]
        %v376 = vld [vmem:[%s278 + $0x70] sm:$0xff]
        %v377 = vld [vmem:[%s278 + $0x78] sm:$0xff]
        %v378 = vld [vmem:[%s278 + $0x80] sm:$0xff]
        %v379 = vld [vmem:[%s278 + $0x88] sm:$0xff]
        %v380 = vld [vmem:[%s278 + $0x90] sm:$0xff]
        %v381 = vld [vmem:[%s278 + $0x98] sm:$0xff]
        %v382 = vld [vmem:[%s278 + $0xa0] sm:$0xff]
        %v383 = vld [vmem:[%s278 + $0xa8] sm:$0xff]
        %v384 = vld [vmem:[%s278 + $0xb0] sm:$0xff]
        %v385 = vld [vmem:[%s278 + $0xb8] sm:$0xff]
        %v386 = vld [vmem:[%s278 + $0xc0] sm:$0xff]
        %v387 = vld [vmem:[%s278 + $0xc8] sm:$0xff]
        %v388 = vld [vmem:[%s278 + $0xd0] sm:$0xff]
        %v389 = vld [vmem:[%s278 + $0xd8] sm:$0xff]
        %v390 = vld [vmem:[%s278 + $0xe0] sm:$0xff]
        %v391 = vld [vmem:[%s278 + $0xe8] sm:$0xff]
        %v392 = vld [vmem:[%s278 + $0xf0] sm:$0xff]
        %v393 = vld [vmem:[%s278 + $0xf8] sm:$0xff]
        %v394 = vld [vmem:[%s278 + $0x100] sm:$0xff]
        %v395 = vld [vmem:[%s278 + $0x108] sm:$0xff]
        %v396 = vld [vmem:[%s278 + $0x110] sm:$0xff]
        %v397 = vld [vmem:[%s278 + $0x118] sm:$0xff]
        %v398 = vld [vmem:[%s278 + $0x120] sm:$0xff]
        %v399 = vld [vmem:[%s278 + $0x128] sm:$0xff]
        %v400 = vld [vmem:[%s244] sm:$0xff]
        %v401 = vld [vmem:[%s244 + $0x8] sm:$0xff]
        %v402 = vld [vmem:[%s244 + $0x10] sm:$0xff]
        %v403 = vld [vmem:[%s244 + $0x18] sm:$0xff]
        %v404 = vld [vmem:[%s244 + $0x20] sm:$0xff]
        %v405 = vld [vmem:[%s244 + $0x28] sm:$0xff]
        %v406 = vld [vmem:[%s244 + $0x30] sm:$0xff]
        %v407 = vld [vmem:[%s244 + $0x38] sm:$0xff]
        %v408 = vld [vmem:[%s244 + $0x40] sm:$0xff]
        %v409 = vld [vmem:[%s244 + $0x48] sm:$0xff]
        %v410 = vld [vmem:[%s244 + $0x50] sm:$0xff]
        %v411 = vld [vmem:[%s244 + $0x58] sm:$0xff]
        %vm412 = vcmask 785408
        %v414 = vsel %vm412, %v362, 0
        %v417 = vsel %vm412, %v363, 0
        %v420 = vsel %vm412, %v364, 0
        %v423 = vsel %vm412, %v365, 0
        %v426 = vsel %vm412, %v366, 0
        %v429 = vsel %vm412, %v367, 0
        %v432 = vsel %vm412, %v368, 0
        %v435 = vsel %vm412, %v369, 0
        %v438 = vsel %vm412, %v370, 0
        %v441 = vsel %vm412, %v371, 0
        %v444 = vsel %vm412, %v372, 0
        %v447 = vsel %vm412, %v373, 0
        %v450 = vsel %vm412, %v374, 0
        %v453 = vsel %vm412, %v375, 0
        %v456 = vsel %vm412, %v376, 0
        %v459 = vsel %vm412, %v377, 0
        %v462 = vsel %vm412, %v378, 0
        %v465 = vsel %vm412, %v379, 0
        %v468 = vsel %vm412, %v380, 0
        %v471 = vsel %vm412, %v381, 0
        %v474 = vsel %vm412, %v382, 0
        %v477 = vsel %vm412, %v383, 0
        %v480 = vsel %vm412, %v384, 0
        %v483 = vsel %vm412, %v385, 0
        %v486 = vsel %vm412, %v386, 0
        %v489 = vsel %vm412, %v387, 0
        %v492 = vsel %vm412, %v388, 0
        %v495 = vsel %vm412, %v389, 0
        %v498 = vsel %vm412, %v390, 0
        %v501 = vsel %vm412, %v391, 0
        %v504 = vsel %vm412, %v392, 0
        %v507 = vsel %vm412, %v393, 0
        %v510 = vsel %vm412, %v394, 0
        %v513 = vsel %vm412, %v395, 0
        %v516 = vsel %vm412, %v396, 0
        %v519 = vsel %vm412, %v397, 0
        %v522 = vsel %vm412, %v398, 0
        %v525 = vsel %vm412, %v399, 0
        %527 = vmatpush.msra.mxu0 0.0
        %528 = vmatpush.msra.mxu0 0.0
        %529 = vmatpush.msra.mxu0 0.0
        %530 = vmatpush.msra.mxu0 0.0
        %v531 = vand.u32 %v411, 4294901760
        %532 = vmatpush.msra.mxu0 %v531
        %v533 = vand.u32 %v410, 4294901760
        %534 = vmatpush.msra.mxu0 %v533
        %v535 = vand.u32 %v409, 4294901760
        %536 = vmatpush.msra.mxu0 %v535
        %v537 = vand.u32 %v408, 4294901760
        %538 = vmatpush.msra.mxu0 %v537
        %v539 = vand.u32 %v407, 4294901760
        %540 = vmatpush.msra.mxu0 %v539
        %v541 = vand.u32 %v406, 4294901760
        %542 = vmatpush.msra.mxu0 %v541
        %v543 = vand.u32 %v405, 4294901760
        %544 = vmatpush.msra.mxu0 %v543
        %v545 = vand.u32 %v404, 4294901760
        %546 = vmatpush.msra.mxu0 %v545
        %v547 = vand.u32 %v403, 4294901760
        %548 = vmatpush.msra.mxu0 %v547
        %v549 = vand.u32 %v402, 4294901760
        %550 = vmatpush.msra.mxu0 %v549
        %v551 = vand.u32 %v401, 4294901760
        %552 = vmatpush.msra.mxu0 %v551
        %v553 = vand.u32 %v400, 4294901760
        %554 = vmatpush.msra.mxu0 %v553
        %v555 = vand.u32 %v414, 4294901760
        %v556 = vsub.f32 %v414, %v555
        %v557 = vand.u32 %v556, 4294901760
        %v558 = vsub.f32 %v556, %v557
        %v559 = vand.u32 %v558, 4294901760
        %560 = vmatmul.f32.gmra.mxu0 %v559
        %v561 = vpop.f32.mrf.mxu0
        %v562 = vadd.f32 0.0, %v561
        %v563 = vand.u32 %v417, 4294901760
        %v564 = vsub.f32 %v417, %v563
        %v565 = vand.u32 %v564, 4294901760
        %v566 = vsub.f32 %v564, %v565
        %v567 = vand.u32 %v566, 4294901760
        %568 = vmatmul.f32.gmra.mxu0 %v567
        %v569 = vpop.f32.mrf.mxu0
        %v570 = vadd.f32 0.0, %v569
        %v571 = vand.u32 %v420, 4294901760
        %v572 = vsub.f32 %v420, %v571
        %v573 = vand.u32 %v572, 4294901760
        %v574 = vsub.f32 %v572, %v573
        %v575 = vand.u32 %v574, 4294901760
        %576 = vmatmul.f32.gmra.mxu0 %v575
        %v577 = vpop.f32.mrf.mxu0
        %v578 = vadd.f32 0.0, %v577
        %v579 = vand.u32 %v423, 4294901760
        %v580 = vsub.f32 %v423, %v579
        %v581 = vand.u32 %v580, 4294901760
        %v582 = vsub.f32 %v580, %v581
        %v583 = vand.u32 %v582, 4294901760
        %584 = vmatmul.f32.gmra.mxu0 %v583
        %v585 = vpop.f32.mrf.mxu0
        %v586 = vadd.f32 0.0, %v585
        %v587 = vand.u32 %v426, 4294901760
        %v588 = vsub.f32 %v426, %v587
        %v589 = vand.u32 %v588, 4294901760
        %v590 = vsub.f32 %v588, %v589
        %v591 = vand.u32 %v590, 4294901760
        %592 = vmatmul.f32.gmra.mxu0 %v591
        %v593 = vpop.f32.mrf.mxu0
        %v594 = vadd.f32 0.0, %v593
        %v595 = vand.u32 %v429, 4294901760
        %v596 = vsub.f32 %v429, %v595
        %v597 = vand.u32 %v596, 4294901760
        %v598 = vsub.f32 %v596, %v597
        %v599 = vand.u32 %v598, 4294901760
        %600 = vmatmul.f32.gmra.mxu0 %v599
        %v601 = vpop.f32.mrf.mxu0
        %v602 = vadd.f32 0.0, %v601
        %v603 = vand.u32 %v432, 4294901760
        %v604 = vsub.f32 %v432, %v603
        %v605 = vand.u32 %v604, 4294901760
        %v606 = vsub.f32 %v604, %v605
        %v607 = vand.u32 %v606, 4294901760
        %608 = vmatmul.f32.gmra.mxu0 %v607
        %v609 = vpop.f32.mrf.mxu0
        %v610 = vadd.f32 0.0, %v609
        %v611 = vand.u32 %v435, 4294901760
        %v612 = vsub.f32 %v435, %v611
        %v613 = vand.u32 %v612, 4294901760
        %v614 = vsub.f32 %v612, %v613
        %v615 = vand.u32 %v614, 4294901760
        %616 = vmatmul.f32.gmra.mxu0 %v615
        %v617 = vpop.f32.mrf.mxu0
        %v618 = vadd.f32 0.0, %v617
        %v619 = vand.u32 %v438, 4294901760
        %v620 = vsub.f32 %v438, %v619
        %v621 = vand.u32 %v620, 4294901760
        %v622 = vsub.f32 %v620, %v621
        %v623 = vand.u32 %v622, 4294901760
        %624 = vmatmul.f32.gmra.mxu0 %v623
        %v625 = vpop.f32.mrf.mxu0
        %v626 = vadd.f32 0.0, %v625
        %v627 = vand.u32 %v441, 4294901760
        %v628 = vsub.f32 %v441, %v627
        %v629 = vand.u32 %v628, 4294901760
        %v630 = vsub.f32 %v628, %v629
        %v631 = vand.u32 %v630, 4294901760
        %632 = vmatmul.f32.gmra.mxu0 %v631
        %v633 = vpop.f32.mrf.mxu0
        %v634 = vadd.f32 0.0, %v633
        %v635 = vand.u32 %v444, 4294901760
        %v636 = vsub.f32 %v444, %v635
        %v637 = vand.u32 %v636, 4294901760
        %v638 = vsub.f32 %v636, %v637
        %v639 = vand.u32 %v638, 4294901760
        %640 = vmatmul.f32.gmra.mxu0 %v639
        %v641 = vpop.f32.mrf.mxu0
        %v642 = vadd.f32 0.0, %v641
        %v643 = vand.u32 %v447, 4294901760
        %v644 = vsub.f32 %v447, %v643
        %v645 = vand.u32 %v644, 4294901760
        %v646 = vsub.f32 %v644, %v645
        %v647 = vand.u32 %v646, 4294901760
        %648 = vmatmul.f32.gmra.mxu0 %v647
        %v649 = vpop.f32.mrf.mxu0
        %v650 = vadd.f32 0.0, %v649
        %v651 = vand.u32 %v450, 4294901760
        %v652 = vsub.f32 %v450, %v651
        %v653 = vand.u32 %v652, 4294901760
        %v654 = vsub.f32 %v652, %v653
        %v655 = vand.u32 %v654, 4294901760
        %656 = vmatmul.f32.gmra.mxu0 %v655
        %v657 = vpop.f32.mrf.mxu0
        %v658 = vadd.f32 0.0, %v657
        %v659 = vand.u32 %v453, 4294901760
        %v660 = vsub.f32 %v453, %v659
        %v661 = vand.u32 %v660, 4294901760
        %v662 = vsub.f32 %v660, %v661
        %v663 = vand.u32 %v662, 4294901760
        %664 = vmatmul.f32.gmra.mxu0 %v663
        %v665 = vpop.f32.mrf.mxu0
        %v666 = vadd.f32 0.0, %v665
        %v667 = vand.u32 %v456, 4294901760
        %v668 = vsub.f32 %v456, %v667
        %v669 = vand.u32 %v668, 4294901760
        %v670 = vsub.f32 %v668, %v669
        %v671 = vand.u32 %v670, 4294901760
        %672 = vmatmul.f32.gmra.mxu0 %v671
        %v673 = vpop.f32.mrf.mxu0
        %v674 = vadd.f32 0.0, %v673
        %v675 = vand.u32 %v459, 4294901760
        %v676 = vsub.f32 %v459, %v675
        %v677 = vand.u32 %v676, 4294901760
        %v678 = vsub.f32 %v676, %v677
        %v679 = vand.u32 %v678, 4294901760
        %680 = vmatmul.f32.gmra.mxu0 %v679
        %v681 = vpop.f32.mrf.mxu0
        %v682 = vadd.f32 0.0, %v681
        %v683 = vand.u32 %v462, 4294901760
        %v684 = vsub.f32 %v462, %v683
        %v685 = vand.u32 %v684, 4294901760
        %v686 = vsub.f32 %v684, %v685
        %v687 = vand.u32 %v686, 4294901760
        %688 = vmatmul.f32.gmra.mxu0 %v687
        %v689 = vpop.f32.mrf.mxu0
        %v690 = vadd.f32 0.0, %v689
        %v691 = vand.u32 %v465, 4294901760
        %v692 = vsub.f32 %v465, %v691
        %v693 = vand.u32 %v692, 4294901760
        %v694 = vsub.f32 %v692, %v693
        %v695 = vand.u32 %v694, 4294901760
        %696 = vmatmul.f32.gmra.mxu0 %v695
        %v697 = vpop.f32.mrf.mxu0
        %v698 = vadd.f32 0.0, %v697
        %v699 = vand.u32 %v468, 4294901760
        %v700 = vsub.f32 %v468, %v699
        %v701 = vand.u32 %v700, 4294901760
        %v702 = vsub.f32 %v700, %v701
        %v703 = vand.u32 %v702, 4294901760
        %704 = vmatmul.f32.gmra.mxu0 %v703
        %v705 = vpop.f32.mrf.mxu0
        %v706 = vadd.f32 0.0, %v705
        %v707 = vand.u32 %v471, 4294901760
        %v708 = vsub.f32 %v471, %v707
        %v709 = vand.u32 %v708, 4294901760
        %v710 = vsub.f32 %v708, %v709
        %v711 = vand.u32 %v710, 4294901760
        %712 = vmatmul.f32.gmra.mxu0 %v711
        %v713 = vpop.f32.mrf.mxu0
        %v714 = vadd.f32 0.0, %v713
        %v715 = vand.u32 %v474, 4294901760
        %v716 = vsub.f32 %v474, %v715
        %v717 = vand.u32 %v716, 4294901760
        %v718 = vsub.f32 %v716, %v717
        %v719 = vand.u32 %v718, 4294901760
        %720 = vmatmul.f32.gmra.mxu0 %v719
        %v721 = vpop.f32.mrf.mxu0
        %v722 = vadd.f32 0.0, %v721
        %v723 = vand.u32 %v477, 4294901760
        %v724 = vsub.f32 %v477, %v723
        %v725 = vand.u32 %v724, 4294901760
        %v726 = vsub.f32 %v724, %v725
        %v727 = vand.u32 %v726, 4294901760
        %728 = vmatmul.f32.gmra.mxu0 %v727
        %v729 = vpop.f32.mrf.mxu0
        %v730 = vadd.f32 0.0, %v729
        %v731 = vand.u32 %v480, 4294901760
        %v732 = vsub.f32 %v480, %v731
        %v733 = vand.u32 %v732, 4294901760
        %v734 = vsub.f32 %v732, %v733
        %v735 = vand.u32 %v734, 4294901760
        %736 = vmatmul.f32.gmra.mxu0 %v735
        %v737 = vpop.f32.mrf.mxu0
        %v738 = vadd.f32 0.0, %v737
        %v739 = vand.u32 %v483, 4294901760
        %v740 = vsub.f32 %v483, %v739
        %v741 = vand.u32 %v740, 4294901760
        %v742 = vsub.f32 %v740, %v741
        %v743 = vand.u32 %v742, 4294901760
        %744 = vmatmul.f32.gmra.mxu0 %v743
        %v745 = vpop.f32.mrf.mxu0
        %v746 = vadd.f32 0.0, %v745
        %v747 = vand.u32 %v486, 4294901760
        %v748 = vsub.f32 %v486, %v747
        %v749 = vand.u32 %v748, 4294901760
        %v750 = vsub.f32 %v748, %v749
        %v751 = vand.u32 %v750, 4294901760
        %752 = vmatmul.f32.gmra.mxu0 %v751
        %v753 = vpop.f32.mrf.mxu0
        %v754 = vadd.f32 0.0, %v753
        %v755 = vand.u32 %v489, 4294901760
        %v756 = vsub.f32 %v489, %v755
        %v757 = vand.u32 %v756, 4294901760
        %v758 = vsub.f32 %v756, %v757
        %v759 = vand.u32 %v758, 4294901760
        %760 = vmatmul.f32.gmra.mxu0 %v759
        %v761 = vpop.f32.mrf.mxu0
        %v762 = vadd.f32 0.0, %v761
        %v763 = vand.u32 %v492, 4294901760
        %v764 = vsub.f32 %v492, %v763
        %v765 = vand.u32 %v764, 4294901760
        %v766 = vsub.f32 %v764, %v765
        %v767 = vand.u32 %v766, 4294901760
        %768 = vmatmul.f32.gmra.mxu0 %v767
        %v769 = vpop.f32.mrf.mxu0
        %v770 = vadd.f32 0.0, %v769
        %v771 = vand.u32 %v495, 4294901760
        %v772 = vsub.f32 %v495, %v771
        %v773 = vand.u32 %v772, 4294901760
        %v774 = vsub.f32 %v772, %v773
        %v775 = vand.u32 %v774, 4294901760
        %776 = vmatmul.f32.gmra.mxu0 %v775
        %v777 = vpop.f32.mrf.mxu0
        %v778 = vadd.f32 0.0, %v777
        %v779 = vand.u32 %v498, 4294901760
        %v780 = vsub.f32 %v498, %v779
        %v781 = vand.u32 %v780, 4294901760
        %v782 = vsub.f32 %v780, %v781
        %v783 = vand.u32 %v782, 4294901760
        %784 = vmatmul.f32.gmra.mxu0 %v783
        %v785 = vpop.f32.mrf.mxu0
        %v786 = vadd.f32 0.0, %v785
        %v787 = vand.u32 %v501, 4294901760
        %v788 = vsub.f32 %v501, %v787
        %v789 = vand.u32 %v788, 4294901760
        %v790 = vsub.f32 %v788, %v789
        %v791 = vand.u32 %v790, 4294901760
        %792 = vmatmul.f32.gmra.mxu0 %v791
        %v793 = vpop.f32.mrf.mxu0
        %v794 = vadd.f32 0.0, %v793
        %v795 = vand.u32 %v504, 4294901760
        %v796 = vsub.f32 %v504, %v795
        %v797 = vand.u32 %v796, 4294901760
        %v798 = vsub.f32 %v796, %v797
        %v799 = vand.u32 %v798, 4294901760
        %800 = vmatmul.f32.gmra.mxu0 %v799
        %v801 = vpop.f32.mrf.mxu0
        %v802 = vadd.f32 0.0, %v801
        %v803 = vand.u32 %v507, 4294901760
        %v804 = vsub.f32 %v507, %v803
        %v805 = vand.u32 %v804, 4294901760
        %v806 = vsub.f32 %v804, %v805
        %v807 = vand.u32 %v806, 4294901760
        %808 = vmatmul.f32.gmra.mxu0 %v807
        %v809 = vpop.f32.mrf.mxu0
        %v810 = vadd.f32 0.0, %v809
        %v811 = vand.u32 %v510, 4294901760
        %v812 = vsub.f32 %v510, %v811
        %v813 = vand.u32 %v812, 4294901760
        %v814 = vsub.f32 %v812, %v813
        %v815 = vand.u32 %v814, 4294901760
        %816 = vmatmul.f32.gmra.mxu0 %v815
        %v817 = vpop.f32.mrf.mxu0
        %v818 = vadd.f32 0.0, %v817
        %v819 = vand.u32 %v513, 4294901760
        %v820 = vsub.f32 %v513, %v819
        %v821 = vand.u32 %v820, 4294901760
        %v822 = vsub.f32 %v820, %v821
        %v823 = vand.u32 %v822, 4294901760
        %824 = vmatmul.f32.gmra.mxu0 %v823
        %v825 = vpop.f32.mrf.mxu0
        %v826 = vadd.f32 0.0, %v825
        %v827 = vand.u32 %v516, 4294901760
        %v828 = vsub.f32 %v516, %v827
        %v829 = vand.u32 %v828, 4294901760
        %v830 = vsub.f32 %v828, %v829
        %v831 = vand.u32 %v830, 4294901760
        %832 = vmatmul.f32.gmra.mxu0 %v831
        %v833 = vpop.f32.mrf.mxu0
        %v834 = vadd.f32 0.0, %v833
        %v835 = vand.u32 %v519, 4294901760
        %v836 = vsub.f32 %v519, %v835
        %v837 = vand.u32 %v836, 4294901760
        %v838 = vsub.f32 %v836, %v837
        %v839 = vand.u32 %v838, 4294901760
        %840 = vmatmul.f32.gmra.mxu0 %v839
        %v841 = vpop.f32.mrf.mxu0
        %v842 = vadd.f32 0.0, %v841
        %v843 = vand.u32 %v522, 4294901760
        %v844 = vsub.f32 %v522, %v843
        %v845 = vand.u32 %v844, 4294901760
        %v846 = vsub.f32 %v844, %v845
        %v847 = vand.u32 %v846, 4294901760
        %848 = vmatmul.f32.gmra.mxu0 %v847
        %v849 = vpop.f32.mrf.mxu0
        %v850 = vadd.f32 0.0, %v849
        %v851 = vand.u32 %v525, 4294901760
        %v852 = vsub.f32 %v525, %v851
        %v853 = vand.u32 %v852, 4294901760
        %v854 = vsub.f32 %v852, %v853
        %v855 = vand.u32 %v854, 4294901760
        %856 = vmatmul.f32.gmra.mxu0 %v855
        %v857 = vpop.f32.mrf.mxu0
        %v858 = vadd.f32 0.0, %v857
        %859 = vdwg.mxu0
        %860 = vmatpush.msra.mxu0 0.0
        %861 = vmatpush.msra.mxu0 0.0
        %862 = vmatpush.msra.mxu0 0.0
        %863 = vmatpush.msra.mxu0 0.0
        %v864 = vand.u32 %v411, 4294901760
        %v865 = vsub.f32 %v411, %v864
        %v866 = vand.u32 %v865, 4294901760
        %v867 = vsub.f32 %v865, %v866
        %v868 = vand.u32 %v867, 4294901760
        %869 = vmatpush.msra.mxu0 %v868
        %v870 = vand.u32 %v410, 4294901760
        %v871 = vsub.f32 %v410, %v870
        %v872 = vand.u32 %v871, 4294901760
        %v873 = vsub.f32 %v871, %v872
        %v874 = vand.u32 %v873, 4294901760
        %875 = vmatpush.msra.mxu0 %v874
        %v876 = vand.u32 %v409, 4294901760
        %v877 = vsub.f32 %v409, %v876
        %v878 = vand.u32 %v877, 4294901760
        %v879 = vsub.f32 %v877, %v878
        %v880 = vand.u32 %v879, 4294901760
        %881 = vmatpush.msra.mxu0 %v880
        %v882 = vand.u32 %v408, 4294901760
        %v883 = vsub.f32 %v408, %v882
        %v884 = vand.u32 %v883, 4294901760
        %v885 = vsub.f32 %v883, %v884
        %v886 = vand.u32 %v885, 4294901760
        %887 = vmatpush.msra.mxu0 %v886
        %v888 = vand.u32 %v407, 4294901760
        %v889 = vsub.f32 %v407, %v888
        %v890 = vand.u32 %v889, 4294901760
        %v891 = vsub.f32 %v889, %v890
        %v892 = vand.u32 %v891, 4294901760
        %893 = vmatpush.msra.mxu0 %v892
        %v894 = vand.u32 %v406, 4294901760
        %v895 = vsub.f32 %v406, %v894
        %v896 = vand.u32 %v895, 4294901760
        %v897 = vsub.f32 %v895, %v896
        %v898 = vand.u32 %v897, 4294901760
        %899 = vmatpush.msra.mxu0 %v898
        %v900 = vand.u32 %v405, 4294901760
        %v901 = vsub.f32 %v405, %v900
        %v902 = vand.u32 %v901, 4294901760
        %v903 = vsub.f32 %v901, %v902
        %v904 = vand.u32 %v903, 4294901760
        %905 = vmatpush.msra.mxu0 %v904
        %v906 = vand.u32 %v404, 4294901760
        %v907 = vsub.f32 %v404, %v906
        %v908 = vand.u32 %v907, 4294901760
        %v909 = vsub.f32 %v907, %v908
        %v910 = vand.u32 %v909, 4294901760
        %911 = vmatpush.msra.mxu0 %v910
        %v912 = vand.u32 %v403, 4294901760
        %v913 = vsub.f32 %v403, %v912
        %v914 = vand.u32 %v913, 4294901760
        %v915 = vsub.f32 %v913, %v914
        %v916 = vand.u32 %v915, 4294901760
        %917 = vmatpush.msra.mxu0 %v916
        %v918 = vand.u32 %v402, 4294901760
        %v919 = vsub.f32 %v402, %v918
        %v920 = vand.u32 %v919, 4294901760
        %v921 = vsub.f32 %v919, %v920
        %v922 = vand.u32 %v921, 4294901760
        %923 = vmatpush.msra.mxu0 %v922
        %v924 = vand.u32 %v401, 4294901760
        %v925 = vsub.f32 %v401, %v924
        %v926 = vand.u32 %v925, 4294901760
        %v927 = vsub.f32 %v925, %v926
        %v928 = vand.u32 %v927, 4294901760
        %929 = vmatpush.msra.mxu0 %v928
        %v930 = vand.u32 %v400, 4294901760
        %v931 = vsub.f32 %v400, %v930
        %v932 = vand.u32 %v931, 4294901760
        %v933 = vsub.f32 %v931, %v932
        %v934 = vand.u32 %v933, 4294901760
        %935 = vmatpush.msra.mxu0 %v934
        %v936 = vand.u32 %v414, 4294901760
        %937 = vmatmul.f32.gmra.mxu0 %v936
        %v938 = vpop.f32.mrf.mxu0
        %v939 = vadd.f32 %v562, %v938
        %v940 = vand.u32 %v417, 4294901760
        %941 = vmatmul.f32.gmra.mxu0 %v940
        %v942 = vpop.f32.mrf.mxu0
        %v943 = vadd.f32 %v570, %v942
        %v944 = vand.u32 %v420, 4294901760
        %945 = vmatmul.f32.gmra.mxu0 %v944
        %v946 = vpop.f32.mrf.mxu0
        %v947 = vadd.f32 %v578, %v946
        %v948 = vand.u32 %v423, 4294901760
        %949 = vmatmul.f32.gmra.mxu0 %v948
        %v950 = vpop.f32.mrf.mxu0
        %v951 = vadd.f32 %v586, %v950
        %v952 = vand.u32 %v426, 4294901760
        %953 = vmatmul.f32.gmra.mxu0 %v952
        %v954 = vpop.f32.mrf.mxu0
        %v955 = vadd.f32 %v594, %v954
        %v956 = vand.u32 %v429, 4294901760
        %957 = vmatmul.f32.gmra.mxu0 %v956
        %v958 = vpop.f32.mrf.mxu0
        %v959 = vadd.f32 %v602, %v958
        %v960 = vand.u32 %v432, 4294901760
        %961 = vmatmul.f32.gmra.mxu0 %v960
        %v962 = vpop.f32.mrf.mxu0
        %v963 = vadd.f32 %v610, %v962
        %v964 = vand.u32 %v435, 4294901760
        %965 = vmatmul.f32.gmra.mxu0 %v964
        %v966 = vpop.f32.mrf.mxu0
        %v967 = vadd.f32 %v618, %v966
        %v968 = vand.u32 %v438, 4294901760
        %969 = vmatmul.f32.gmra.mxu0 %v968
        %v970 = vpop.f32.mrf.mxu0
        %v971 = vadd.f32 %v626, %v970
        %v972 = vand.u32 %v441, 4294901760
        %973 = vmatmul.f32.gmra.mxu0 %v972
        %v974 = vpop.f32.mrf.mxu0
        %v975 = vadd.f32 %v634, %v974
        %v976 = vand.u32 %v444, 4294901760
        %977 = vmatmul.f32.gmra.mxu0 %v976
        %v978 = vpop.f32.mrf.mxu0
        %v979 = vadd.f32 %v642, %v978
        %v980 = vand.u32 %v447, 4294901760
        %981 = vmatmul.f32.gmra.mxu0 %v980
        %v982 = vpop.f32.mrf.mxu0
        %v983 = vadd.f32 %v650, %v982
        %v984 = vand.u32 %v450, 4294901760
        %985 = vmatmul.f32.gmra.mxu0 %v984
        %v986 = vpop.f32.mrf.mxu0
        %v987 = vadd.f32 %v658, %v986
        %v988 = vand.u32 %v453, 4294901760
        %989 = vmatmul.f32.gmra.mxu0 %v988
        %v990 = vpop.f32.mrf.mxu0
        %v991 = vadd.f32 %v666, %v990
        %v992 = vand.u32 %v456, 4294901760
        %993 = vmatmul.f32.gmra.mxu0 %v992
        %v994 = vpop.f32.mrf.mxu0
        %v995 = vadd.f32 %v674, %v994
        %v996 = vand.u32 %v459, 4294901760
        %997 = vmatmul.f32.gmra.mxu0 %v996
        %v998 = vpop.f32.mrf.mxu0
        %v999 = vadd.f32 %v682, %v998
        %v1000 = vand.u32 %v462, 4294901760
        %1001 = vmatmul.f32.gmra.mxu0 %v1000
        %v1002 = vpop.f32.mrf.mxu0
        %v1003 = vadd.f32 %v690, %v1002
        %v1004 = vand.u32 %v465, 4294901760
        %1005 = vmatmul.f32.gmra.mxu0 %v1004
        %v1006 = vpop.f32.mrf.mxu0
        %v1007 = vadd.f32 %v698, %v1006
        %v1008 = vand.u32 %v468, 4294901760
        %1009 = vmatmul.f32.gmra.mxu0 %v1008
        %v1010 = vpop.f32.mrf.mxu0
        %v1011 = vadd.f32 %v706, %v1010
        %v1012 = vand.u32 %v471, 4294901760
        %1013 = vmatmul.f32.gmra.mxu0 %v1012
        %v1014 = vpop.f32.mrf.mxu0
        %v1015 = vadd.f32 %v714, %v1014
        %v1016 = vand.u32 %v474, 4294901760
        %1017 = vmatmul.f32.gmra.mxu0 %v1016
        %v1018 = vpop.f32.mrf.mxu0
        %v1019 = vadd.f32 %v722, %v1018
        %v1020 = vand.u32 %v477, 4294901760
        %1021 = vmatmul.f32.gmra.mxu0 %v1020
        %v1022 = vpop.f32.mrf.mxu0
        %v1023 = vadd.f32 %v730, %v1022
        %v1024 = vand.u32 %v480, 4294901760
        %1025 = vmatmul.f32.gmra.mxu0 %v1024
        %v1026 = vpop.f32.mrf.mxu0
        %v1027 = vadd.f32 %v738, %v1026
        %v1028 = vand.u32 %v483, 4294901760
        %1029 = vmatmul.f32.gmra.mxu0 %v1028
        %v1030 = vpop.f32.mrf.mxu0
        %v1031 = vadd.f32 %v746, %v1030
        %v1032 = vand.u32 %v486, 4294901760
        %1033 = vmatmul.f32.gmra.mxu0 %v1032
        %v1034 = vpop.f32.mrf.mxu0
        %v1035 = vadd.f32 %v754, %v1034
        %v1036 = vand.u32 %v489, 4294901760
        %1037 = vmatmul.f32.gmra.mxu0 %v1036
        %v1038 = vpop.f32.mrf.mxu0
        %v1039 = vadd.f32 %v762, %v1038
        %v1040 = vand.u32 %v492, 4294901760
        %1041 = vmatmul.f32.gmra.mxu0 %v1040
        %v1042 = vpop.f32.mrf.mxu0
        %v1043 = vadd.f32 %v770, %v1042
        %v1044 = vand.u32 %v495, 4294901760
        %1045 = vmatmul.f32.gmra.mxu0 %v1044
        %v1046 = vpop.f32.mrf.mxu0
        %v1047 = vadd.f32 %v778, %v1046
        %v1048 = vand.u32 %v498, 4294901760
        %1049 = vmatmul.f32.gmra.mxu0 %v1048
        %v1050 = vpop.f32.mrf.mxu0
        %v1051 = vadd.f32 %v786, %v1050
        %v1052 = vand.u32 %v501, 4294901760
        %1053 = vmatmul.f32.gmra.mxu0 %v1052
        %v1054 = vpop.f32.mrf.mxu0
        %v1055 = vadd.f32 %v794, %v1054
        %v1056 = vand.u32 %v504, 4294901760
        %1057 = vmatmul.f32.gmra.mxu0 %v1056
        %v1058 = vpop.f32.mrf.mxu0
        %v1059 = vadd.f32 %v802, %v1058
        %v1060 = vand.u32 %v507, 4294901760
        %1061 = vmatmul.f32.gmra.mxu0 %v1060
        %v1062 = vpop.f32.mrf.mxu0
        %v1063 = vadd.f32 %v810, %v1062
        %v1064 = vand.u32 %v510, 4294901760
        %1065 = vmatmul.f32.gmra.mxu0 %v1064
        %v1066 = vpop.f32.mrf.mxu0
        %v1067 = vadd.f32 %v818, %v1066
        %v1068 = vand.u32 %v513, 4294901760
        %1069 = vmatmul.f32.gmra.mxu0 %v1068
        %v1070 = vpop.f32.mrf.mxu0
        %v1071 = vadd.f32 %v826, %v1070
        %v1072 = vand.u32 %v516, 4294901760
        %1073 = vmatmul.f32.gmra.mxu0 %v1072
        %v1074 = vpop.f32.mrf.mxu0
        %v1075 = vadd.f32 %v834, %v1074
        %v1076 = vand.u32 %v519, 4294901760
        %1077 = vmatmul.f32.gmra.mxu0 %v1076
        %v1078 = vpop.f32.mrf.mxu0
        %v1079 = vadd.f32 %v842, %v1078
        %v1080 = vand.u32 %v522, 4294901760
        %1081 = vmatmul.f32.gmra.mxu0 %v1080
        %v1082 = vpop.f32.mrf.mxu0
        %v1083 = vadd.f32 %v850, %v1082
        %v1084 = vand.u32 %v525, 4294901760
        %1085 = vmatmul.f32.gmra.mxu0 %v1084
        %v1086 = vpop.f32.mrf.mxu0
        %v1087 = vadd.f32 %v858, %v1086
        %1088 = vdwg.mxu0
        %1089 = vmatpush.msra.mxu0 0.0
        %1090 = vmatpush.msra.mxu0 0.0
        %1091 = vmatpush.msra.mxu0 0.0
        %1092 = vmatpush.msra.mxu0 0.0
        %v1093 = vand.u32 %v411, 4294901760
        %v1094 = vsub.f32 %v411, %v1093
        %1095 = vmatpush.msra.mxu0 %v1094
        %v1096 = vand.u32 %v410, 4294901760
        %v1097 = vsub.f32 %v410, %v1096
        %1098 = vmatpush.msra.mxu0 %v1097
        %v1099 = vand.u32 %v409, 4294901760
        %v1100 = vsub.f32 %v409, %v1099
        %1101 = vmatpush.msra.mxu0 %v1100
        %v1102 = vand.u32 %v408, 4294901760
        %v1103 = vsub.f32 %v408, %v1102
        %1104 = vmatpush.msra.mxu0 %v1103
        %v1105 = vand.u32 %v407, 4294901760
        %v1106 = vsub.f32 %v407, %v1105
        %1107 = vmatpush.msra.mxu0 %v1106
        %v1108 = vand.u32 %v406, 4294901760
        %v1109 = vsub.f32 %v406, %v1108
        %1110 = vmatpush.msra.mxu0 %v1109
        %v1111 = vand.u32 %v405, 4294901760
        %v1112 = vsub.f32 %v405, %v1111
        %1113 = vmatpush.msra.mxu0 %v1112
        %v1114 = vand.u32 %v404, 4294901760
        %v1115 = vsub.f32 %v404, %v1114
        %1116 = vmatpush.msra.mxu0 %v1115
        %v1117 = vand.u32 %v403, 4294901760
        %v1118 = vsub.f32 %v403, %v1117
        %1119 = vmatpush.msra.mxu0 %v1118
        %v1120 = vand.u32 %v402, 4294901760
        %v1121 = vsub.f32 %v402, %v1120
        %1122 = vmatpush.msra.mxu0 %v1121
        %v1123 = vand.u32 %v401, 4294901760
        %v1124 = vsub.f32 %v401, %v1123
        %1125 = vmatpush.msra.mxu0 %v1124
        %v1126 = vand.u32 %v400, 4294901760
        %v1127 = vsub.f32 %v400, %v1126
        %1128 = vmatpush.msra.mxu0 %v1127
        %v1129 = vand.u32 %v414, 4294901760
        %v1130 = vsub.f32 %v414, %v1129
        %1131 = vmatmul.f32.gmra.mxu0 %v1130
        %v1132 = vpop.f32.mrf.mxu0
        %v1133 = vadd.f32 %v939, %v1132
        %v1134 = vand.u32 %v417, 4294901760
        %v1135 = vsub.f32 %v417, %v1134
        %1136 = vmatmul.f32.gmra.mxu0 %v1135
        %v1137 = vpop.f32.mrf.mxu0
        %v1138 = vadd.f32 %v943, %v1137
        %v1139 = vand.u32 %v420, 4294901760
        %v1140 = vsub.f32 %v420, %v1139
        %1141 = vmatmul.f32.gmra.mxu0 %v1140
        %v1142 = vpop.f32.mrf.mxu0
        %v1143 = vadd.f32 %v947, %v1142
        %v1144 = vand.u32 %v423, 4294901760
        %v1145 = vsub.f32 %v423, %v1144
        %1146 = vmatmul.f32.gmra.mxu0 %v1145
        %v1147 = vpop.f32.mrf.mxu0
        %v1148 = vadd.f32 %v951, %v1147
        %v1149 = vand.u32 %v426, 4294901760
        %v1150 = vsub.f32 %v426, %v1149
        %1151 = vmatmul.f32.gmra.mxu0 %v1150
        %v1152 = vpop.f32.mrf.mxu0
        %v1153 = vadd.f32 %v955, %v1152
        %v1154 = vand.u32 %v429, 4294901760
        %v1155 = vsub.f32 %v429, %v1154
        %1156 = vmatmul.f32.gmra.mxu0 %v1155
        %v1157 = vpop.f32.mrf.mxu0
        %v1158 = vadd.f32 %v959, %v1157
        %v1159 = vand.u32 %v432, 4294901760
        %v1160 = vsub.f32 %v432, %v1159
        %1161 = vmatmul.f32.gmra.mxu0 %v1160
        %v1162 = vpop.f32.mrf.mxu0
        %v1163 = vadd.f32 %v963, %v1162
        %v1164 = vand.u32 %v435, 4294901760
        %v1165 = vsub.f32 %v435, %v1164
        %1166 = vmatmul.f32.gmra.mxu0 %v1165
        %v1167 = vpop.f32.mrf.mxu0
        %v1168 = vadd.f32 %v967, %v1167
        %v1169 = vand.u32 %v438, 4294901760
        %v1170 = vsub.f32 %v438, %v1169
        %1171 = vmatmul.f32.gmra.mxu0 %v1170
        %v1172 = vpop.f32.mrf.mxu0
        %v1173 = vadd.f32 %v971, %v1172
        %v1174 = vand.u32 %v441, 4294901760
        %v1175 = vsub.f32 %v441, %v1174
        %1176 = vmatmul.f32.gmra.mxu0 %v1175
        %v1177 = vpop.f32.mrf.mxu0
        %v1178 = vadd.f32 %v975, %v1177
        %v1179 = vand.u32 %v444, 4294901760
        %v1180 = vsub.f32 %v444, %v1179
        %1181 = vmatmul.f32.gmra.mxu0 %v1180
        %v1182 = vpop.f32.mrf.mxu0
        %v1183 = vadd.f32 %v979, %v1182
        %v1184 = vand.u32 %v447, 4294901760
        %v1185 = vsub.f32 %v447, %v1184
        %1186 = vmatmul.f32.gmra.mxu0 %v1185
        %v1187 = vpop.f32.mrf.mxu0
        %v1188 = vadd.f32 %v983, %v1187
        %v1189 = vand.u32 %v450, 4294901760
        %v1190 = vsub.f32 %v450, %v1189
        %1191 = vmatmul.f32.gmra.mxu0 %v1190
        %v1192 = vpop.f32.mrf.mxu0
        %v1193 = vadd.f32 %v987, %v1192
        %v1194 = vand.u32 %v453, 4294901760
        %v1195 = vsub.f32 %v453, %v1194
        %1196 = vmatmul.f32.gmra.mxu0 %v1195
        %v1197 = vpop.f32.mrf.mxu0
        %v1198 = vadd.f32 %v991, %v1197
        %v1199 = vand.u32 %v456, 4294901760
        %v1200 = vsub.f32 %v456, %v1199
        %1201 = vmatmul.f32.gmra.mxu0 %v1200
        %v1202 = vpop.f32.mrf.mxu0
        %v1203 = vadd.f32 %v995, %v1202
        %v1204 = vand.u32 %v459, 4294901760
        %v1205 = vsub.f32 %v459, %v1204
        %1206 = vmatmul.f32.gmra.mxu0 %v1205
        %v1207 = vpop.f32.mrf.mxu0
        %v1208 = vadd.f32 %v999, %v1207
        %v1209 = vand.u32 %v462, 4294901760
        %v1210 = vsub.f32 %v462, %v1209
        %1211 = vmatmul.f32.gmra.mxu0 %v1210
        %v1212 = vpop.f32.mrf.mxu0
        %v1213 = vadd.f32 %v1003, %v1212
        %v1214 = vand.u32 %v465, 4294901760
        %v1215 = vsub.f32 %v465, %v1214
        %1216 = vmatmul.f32.gmra.mxu0 %v1215
        %v1217 = vpop.f32.mrf.mxu0
        %v1218 = vadd.f32 %v1007, %v1217
        %v1219 = vand.u32 %v468, 4294901760
        %v1220 = vsub.f32 %v468, %v1219
        %1221 = vmatmul.f32.gmra.mxu0 %v1220
        %v1222 = vpop.f32.mrf.mxu0
        %v1223 = vadd.f32 %v1011, %v1222
        %v1224 = vand.u32 %v471, 4294901760
        %v1225 = vsub.f32 %v471, %v1224
        %1226 = vmatmul.f32.gmra.mxu0 %v1225
        %v1227 = vpop.f32.mrf.mxu0
        %v1228 = vadd.f32 %v1015, %v1227
        %v1229 = vand.u32 %v474, 4294901760
        %v1230 = vsub.f32 %v474, %v1229
        %1231 = vmatmul.f32.gmra.mxu0 %v1230
        %v1232 = vpop.f32.mrf.mxu0
        %v1233 = vadd.f32 %v1019, %v1232
        %v1234 = vand.u32 %v477, 4294901760
        %v1235 = vsub.f32 %v477, %v1234
        %1236 = vmatmul.f32.gmra.mxu0 %v1235
        %v1237 = vpop.f32.mrf.mxu0
        %v1238 = vadd.f32 %v1023, %v1237
        %v1239 = vand.u32 %v480, 4294901760
        %v1240 = vsub.f32 %v480, %v1239
        %1241 = vmatmul.f32.gmra.mxu0 %v1240
        %v1242 = vpop.f32.mrf.mxu0
        %v1243 = vadd.f32 %v1027, %v1242
        %v1244 = vand.u32 %v483, 4294901760
        %v1245 = vsub.f32 %v483, %v1244
        %1246 = vmatmul.f32.gmra.mxu0 %v1245
        %v1247 = vpop.f32.mrf.mxu0
        %v1248 = vadd.f32 %v1031, %v1247
        %v1249 = vand.u32 %v486, 4294901760
        %v1250 = vsub.f32 %v486, %v1249
        %1251 = vmatmul.f32.gmra.mxu0 %v1250
        %v1252 = vpop.f32.mrf.mxu0
        %v1253 = vadd.f32 %v1035, %v1252
        %v1254 = vand.u32 %v489, 4294901760
        %v1255 = vsub.f32 %v489, %v1254
        %1256 = vmatmul.f32.gmra.mxu0 %v1255
        %v1257 = vpop.f32.mrf.mxu0
        %v1258 = vadd.f32 %v1039, %v1257
        %v1259 = vand.u32 %v492, 4294901760
        %v1260 = vsub.f32 %v492, %v1259
        %1261 = vmatmul.f32.gmra.mxu0 %v1260
        %v1262 = vpop.f32.mrf.mxu0
        %v1263 = vadd.f32 %v1043, %v1262
        %v1264 = vand.u32 %v495, 4294901760
        %v1265 = vsub.f32 %v495, %v1264
        %1266 = vmatmul.f32.gmra.mxu0 %v1265
        %v1267 = vpop.f32.mrf.mxu0
        %v1268 = vadd.f32 %v1047, %v1267
        %v1269 = vand.u32 %v498, 4294901760
        %v1270 = vsub.f32 %v498, %v1269
        %1271 = vmatmul.f32.gmra.mxu0 %v1270
        %v1272 = vpop.f32.mrf.mxu0
        %v1273 = vadd.f32 %v1051, %v1272
        %v1274 = vand.u32 %v501, 4294901760
        %v1275 = vsub.f32 %v501, %v1274
        %1276 = vmatmul.f32.gmra.mxu0 %v1275
        %v1277 = vpop.f32.mrf.mxu0
        %v1278 = vadd.f32 %v1055, %v1277
        %v1279 = vand.u32 %v504, 4294901760
        %v1280 = vsub.f32 %v504, %v1279
        %1281 = vmatmul.f32.gmra.mxu0 %v1280
        %v1282 = vpop.f32.mrf.mxu0
        %v1283 = vadd.f32 %v1059, %v1282
        %v1284 = vand.u32 %v507, 4294901760
        %v1285 = vsub.f32 %v507, %v1284
        %1286 = vmatmul.f32.gmra.mxu0 %v1285
        %v1287 = vpop.f32.mrf.mxu0
        %v1288 = vadd.f32 %v1063, %v1287
        %v1289 = vand.u32 %v510, 4294901760
        %v1290 = vsub.f32 %v510, %v1289
        %1291 = vmatmul.f32.gmra.mxu0 %v1290
        %v1292 = vpop.f32.mrf.mxu0
        %v1293 = vadd.f32 %v1067, %v1292
        %v1294 = vand.u32 %v513, 4294901760
        %v1295 = vsub.f32 %v513, %v1294
        %1296 = vmatmul.f32.gmra.mxu0 %v1295
        %v1297 = vpop.f32.mrf.mxu0
        %v1298 = vadd.f32 %v1071, %v1297
        %v1299 = vand.u32 %v516, 4294901760
        %v1300 = vsub.f32 %v516, %v1299
        %1301 = vmatmul.f32.gmra.mxu0 %v1300
        %v1302 = vpop.f32.mrf.mxu0
        %v1303 = vadd.f32 %v1075, %v1302
        %v1304 = vand.u32 %v519, 4294901760
        %v1305 = vsub.f32 %v519, %v1304
        %1306 = vmatmul.f32.gmra.mxu0 %v1305
        %v1307 = vpop.f32.mrf.mxu0
        %v1308 = vadd.f32 %v1079, %v1307
        %v1309 = vand.u32 %v522, 4294901760
        %v1310 = vsub.f32 %v522, %v1309
        %1311 = vmatmul.f32.gmra.mxu0 %v1310
        %v1312 = vpop.f32.mrf.mxu0
        %v1313 = vadd.f32 %v1083, %v1312
        %v1314 = vand.u32 %v525, 4294901760
        %v1315 = vsub.f32 %v525, %v1314
        %1316 = vmatmul.f32.gmra.mxu0 %v1315
        %v1317 = vpop.f32.mrf.mxu0
        %v1318 = vadd.f32 %v1087, %v1317
        %1319 = vdwg.mxu0
        %1320 = vmatpush.msra.mxu0 0.0
        %1321 = vmatpush.msra.mxu0 0.0
        %1322 = vmatpush.msra.mxu0 0.0
        %1323 = vmatpush.msra.mxu0 0.0
        %v1324 = vand.u32 %v411, 4294901760
        %1325 = vmatpush.msra.mxu0 %v1324
        %v1326 = vand.u32 %v410, 4294901760
        %1327 = vmatpush.msra.mxu0 %v1326
        %v1328 = vand.u32 %v409, 4294901760
        %1329 = vmatpush.msra.mxu0 %v1328
        %v1330 = vand.u32 %v408, 4294901760
        %1331 = vmatpush.msra.mxu0 %v1330
        %v1332 = vand.u32 %v407, 4294901760
        %1333 = vmatpush.msra.mxu0 %v1332
        %v1334 = vand.u32 %v406, 4294901760
        %1335 = vmatpush.msra.mxu0 %v1334
        %v1336 = vand.u32 %v405, 4294901760
        %1337 = vmatpush.msra.mxu0 %v1336
        %v1338 = vand.u32 %v404, 4294901760
        %1339 = vmatpush.msra.mxu0 %v1338
        %v1340 = vand.u32 %v403, 4294901760
        %1341 = vmatpush.msra.mxu0 %v1340
        %v1342 = vand.u32 %v402, 4294901760
        %1343 = vmatpush.msra.mxu0 %v1342
        %v1344 = vand.u32 %v401, 4294901760
        %1345 = vmatpush.msra.mxu0 %v1344
        %v1346 = vand.u32 %v400, 4294901760
        %1347 = vmatpush.msra.mxu0 %v1346
        %v1348 = vand.u32 %v414, 4294901760
        %v1349 = vsub.f32 %v414, %v1348
        %v1350 = vand.u32 %v1349, 4294901760
        %1351 = vmatmul.f32.gmra.mxu0 %v1350
        %v1352 = vpop.f32.mrf.mxu0
        %v1353 = vadd.f32 %v1133, %v1352
        %v1354 = vand.u32 %v417, 4294901760
        %v1355 = vsub.f32 %v417, %v1354
        %v1356 = vand.u32 %v1355, 4294901760
        %1357 = vmatmul.f32.gmra.mxu0 %v1356
        %v1358 = vpop.f32.mrf.mxu0
        %v1359 = vadd.f32 %v1138, %v1358
        %v1360 = vand.u32 %v420, 4294901760
        %v1361 = vsub.f32 %v420, %v1360
        %v1362 = vand.u32 %v1361, 4294901760
        %1363 = vmatmul.f32.gmra.mxu0 %v1362
        %v1364 = vpop.f32.mrf.mxu0
        %v1365 = vadd.f32 %v1143, %v1364
        %v1366 = vand.u32 %v423, 4294901760
        %v1367 = vsub.f32 %v423, %v1366
        %v1368 = vand.u32 %v1367, 4294901760
        %1369 = vmatmul.f32.gmra.mxu0 %v1368
        %v1370 = vpop.f32.mrf.mxu0
        %v1371 = vadd.f32 %v1148, %v1370
        %v1372 = vand.u32 %v426, 4294901760
        %v1373 = vsub.f32 %v426, %v1372
        %v1374 = vand.u32 %v1373, 4294901760
        %1375 = vmatmul.f32.gmra.mxu0 %v1374
        %v1376 = vpop.f32.mrf.mxu0
        %v1377 = vadd.f32 %v1153, %v1376
        %v1378 = vand.u32 %v429, 4294901760
        %v1379 = vsub.f32 %v429, %v1378
        %v1380 = vand.u32 %v1379, 4294901760
        %1381 = vmatmul.f32.gmra.mxu0 %v1380
        %v1382 = vpop.f32.mrf.mxu0
        %v1383 = vadd.f32 %v1158, %v1382
        %v1384 = vand.u32 %v432, 4294901760
        %v1385 = vsub.f32 %v432, %v1384
        %v1386 = vand.u32 %v1385, 4294901760
        %1387 = vmatmul.f32.gmra.mxu0 %v1386
        %v1388 = vpop.f32.mrf.mxu0
        %v1389 = vadd.f32 %v1163, %v1388
        %v1390 = vand.u32 %v435, 4294901760
        %v1391 = vsub.f32 %v435, %v1390
        %v1392 = vand.u32 %v1391, 4294901760
        %1393 = vmatmul.f32.gmra.mxu0 %v1392
        %v1394 = vpop.f32.mrf.mxu0
        %v1395 = vadd.f32 %v1168, %v1394
        %v1396 = vand.u32 %v438, 4294901760
        %v1397 = vsub.f32 %v438, %v1396
        %v1398 = vand.u32 %v1397, 4294901760
        %1399 = vmatmul.f32.gmra.mxu0 %v1398
        %v1400 = vpop.f32.mrf.mxu0
        %v1401 = vadd.f32 %v1173, %v1400
        %v1402 = vand.u32 %v441, 4294901760
        %v1403 = vsub.f32 %v441, %v1402
        %v1404 = vand.u32 %v1403, 4294901760
        %1405 = vmatmul.f32.gmra.mxu0 %v1404
        %v1406 = vpop.f32.mrf.mxu0
        %v1407 = vadd.f32 %v1178, %v1406
        %v1408 = vand.u32 %v444, 4294901760
        %v1409 = vsub.f32 %v444, %v1408
        %v1410 = vand.u32 %v1409, 4294901760
        %1411 = vmatmul.f32.gmra.mxu0 %v1410
        %v1412 = vpop.f32.mrf.mxu0
        %v1413 = vadd.f32 %v1183, %v1412
        %v1414 = vand.u32 %v447, 4294901760
        %v1415 = vsub.f32 %v447, %v1414
        %v1416 = vand.u32 %v1415, 4294901760
        %1417 = vmatmul.f32.gmra.mxu0 %v1416
        %v1418 = vpop.f32.mrf.mxu0
        %v1419 = vadd.f32 %v1188, %v1418
        %v1420 = vand.u32 %v450, 4294901760
        %v1421 = vsub.f32 %v450, %v1420
        %v1422 = vand.u32 %v1421, 4294901760
        %1423 = vmatmul.f32.gmra.mxu0 %v1422
        %v1424 = vpop.f32.mrf.mxu0
        %v1425 = vadd.f32 %v1193, %v1424
        %v1426 = vand.u32 %v453, 4294901760
        %v1427 = vsub.f32 %v453, %v1426
        %v1428 = vand.u32 %v1427, 4294901760
        %1429 = vmatmul.f32.gmra.mxu0 %v1428
        %v1430 = vpop.f32.mrf.mxu0
        %v1431 = vadd.f32 %v1198, %v1430
        %v1432 = vand.u32 %v456, 4294901760
        %v1433 = vsub.f32 %v456, %v1432
        %v1434 = vand.u32 %v1433, 4294901760
        %1435 = vmatmul.f32.gmra.mxu0 %v1434
        %v1436 = vpop.f32.mrf.mxu0
        %v1437 = vadd.f32 %v1203, %v1436
        %v1438 = vand.u32 %v459, 4294901760
        %v1439 = vsub.f32 %v459, %v1438
        %v1440 = vand.u32 %v1439, 4294901760
        %1441 = vmatmul.f32.gmra.mxu0 %v1440
        %v1442 = vpop.f32.mrf.mxu0
        %v1443 = vadd.f32 %v1208, %v1442
        %v1444 = vand.u32 %v462, 4294901760
        %v1445 = vsub.f32 %v462, %v1444
        %v1446 = vand.u32 %v1445, 4294901760
        %1447 = vmatmul.f32.gmra.mxu0 %v1446
        %v1448 = vpop.f32.mrf.mxu0
        %v1449 = vadd.f32 %v1213, %v1448
        %v1450 = vand.u32 %v465, 4294901760
        %v1451 = vsub.f32 %v465, %v1450
        %v1452 = vand.u32 %v1451, 4294901760
        %1453 = vmatmul.f32.gmra.mxu0 %v1452
        %v1454 = vpop.f32.mrf.mxu0
        %v1455 = vadd.f32 %v1218, %v1454
        %v1456 = vand.u32 %v468, 4294901760
        %v1457 = vsub.f32 %v468, %v1456
        %v1458 = vand.u32 %v1457, 4294901760
        %1459 = vmatmul.f32.gmra.mxu0 %v1458
        %v1460 = vpop.f32.mrf.mxu0
        %v1461 = vadd.f32 %v1223, %v1460
        %v1462 = vand.u32 %v471, 4294901760
        %v1463 = vsub.f32 %v471, %v1462
        %v1464 = vand.u32 %v1463, 4294901760
        %1465 = vmatmul.f32.gmra.mxu0 %v1464
        %v1466 = vpop.f32.mrf.mxu0
        %v1467 = vadd.f32 %v1228, %v1466
        %v1468 = vand.u32 %v474, 4294901760
        %v1469 = vsub.f32 %v474, %v1468
        %v1470 = vand.u32 %v1469, 4294901760
        %1471 = vmatmul.f32.gmra.mxu0 %v1470
        %v1472 = vpop.f32.mrf.mxu0
        %v1473 = vadd.f32 %v1233, %v1472
        %v1474 = vand.u32 %v477, 4294901760
        %v1475 = vsub.f32 %v477, %v1474
        %v1476 = vand.u32 %v1475, 4294901760
        %1477 = vmatmul.f32.gmra.mxu0 %v1476
        %v1478 = vpop.f32.mrf.mxu0
        %v1479 = vadd.f32 %v1238, %v1478
        %v1480 = vand.u32 %v480, 4294901760
        %v1481 = vsub.f32 %v480, %v1480
        %v1482 = vand.u32 %v1481, 4294901760
        %1483 = vmatmul.f32.gmra.mxu0 %v1482
        %v1484 = vpop.f32.mrf.mxu0
        %v1485 = vadd.f32 %v1243, %v1484
        %v1486 = vand.u32 %v483, 4294901760
        %v1487 = vsub.f32 %v483, %v1486
        %v1488 = vand.u32 %v1487, 4294901760
        %1489 = vmatmul.f32.gmra.mxu0 %v1488
        %v1490 = vpop.f32.mrf.mxu0
        %v1491 = vadd.f32 %v1248, %v1490
        %v1492 = vand.u32 %v486, 4294901760
        %v1493 = vsub.f32 %v486, %v1492
        %v1494 = vand.u32 %v1493, 4294901760
        %1495 = vmatmul.f32.gmra.mxu0 %v1494
        %v1496 = vpop.f32.mrf.mxu0
        %v1497 = vadd.f32 %v1253, %v1496
        %v1498 = vand.u32 %v489, 4294901760
        %v1499 = vsub.f32 %v489, %v1498
        %v1500 = vand.u32 %v1499, 4294901760
        %1501 = vmatmul.f32.gmra.mxu0 %v1500
        %v1502 = vpop.f32.mrf.mxu0
        %v1503 = vadd.f32 %v1258, %v1502
        %v1504 = vand.u32 %v492, 4294901760
        %v1505 = vsub.f32 %v492, %v1504
        %v1506 = vand.u32 %v1505, 4294901760
        %1507 = vmatmul.f32.gmra.mxu0 %v1506
        %v1508 = vpop.f32.mrf.mxu0
        %v1509 = vadd.f32 %v1263, %v1508
        %v1510 = vand.u32 %v495, 4294901760
        %v1511 = vsub.f32 %v495, %v1510
        %v1512 = vand.u32 %v1511, 4294901760
        %1513 = vmatmul.f32.gmra.mxu0 %v1512
        %v1514 = vpop.f32.mrf.mxu0
        %v1515 = vadd.f32 %v1268, %v1514
        %v1516 = vand.u32 %v498, 4294901760
        %v1517 = vsub.f32 %v498, %v1516
        %v1518 = vand.u32 %v1517, 4294901760
        %1519 = vmatmul.f32.gmra.mxu0 %v1518
        %v1520 = vpop.f32.mrf.mxu0
        %v1521 = vadd.f32 %v1273, %v1520
        %v1522 = vand.u32 %v501, 4294901760
        %v1523 = vsub.f32 %v501, %v1522
        %v1524 = vand.u32 %v1523, 4294901760
        %1525 = vmatmul.f32.gmra.mxu0 %v1524
        %v1526 = vpop.f32.mrf.mxu0
        %v1527 = vadd.f32 %v1278, %v1526
        %v1528 = vand.u32 %v504, 4294901760
        %v1529 = vsub.f32 %v504, %v1528
        %v1530 = vand.u32 %v1529, 4294901760
        %1531 = vmatmul.f32.gmra.mxu0 %v1530
        %v1532 = vpop.f32.mrf.mxu0
        %v1533 = vadd.f32 %v1283, %v1532
        %v1534 = vand.u32 %v507, 4294901760
        %v1535 = vsub.f32 %v507, %v1534
        %v1536 = vand.u32 %v1535, 4294901760
        %1537 = vmatmul.f32.gmra.mxu0 %v1536
        %v1538 = vpop.f32.mrf.mxu0
        %v1539 = vadd.f32 %v1288, %v1538
        %v1540 = vand.u32 %v510, 4294901760
        %v1541 = vsub.f32 %v510, %v1540
        %v1542 = vand.u32 %v1541, 4294901760
        %1543 = vmatmul.f32.gmra.mxu0 %v1542
        %v1544 = vpop.f32.mrf.mxu0
        %v1545 = vadd.f32 %v1293, %v1544
        %v1546 = vand.u32 %v513, 4294901760
        %v1547 = vsub.f32 %v513, %v1546
        %v1548 = vand.u32 %v1547, 4294901760
        %1549 = vmatmul.f32.gmra.mxu0 %v1548
        %v1550 = vpop.f32.mrf.mxu0
        %v1551 = vadd.f32 %v1298, %v1550
        %v1552 = vand.u32 %v516, 4294901760
        %v1553 = vsub.f32 %v516, %v1552
        %v1554 = vand.u32 %v1553, 4294901760
        %1555 = vmatmul.f32.gmra.mxu0 %v1554
        %v1556 = vpop.f32.mrf.mxu0
        %v1557 = vadd.f32 %v1303, %v1556
        %v1558 = vand.u32 %v519, 4294901760
        %v1559 = vsub.f32 %v519, %v1558
        %v1560 = vand.u32 %v1559, 4294901760
        %1561 = vmatmul.f32.gmra.mxu0 %v1560
        %v1562 = vpop.f32.mrf.mxu0
        %v1563 = vadd.f32 %v1308, %v1562
        %v1564 = vand.u32 %v522, 4294901760
        %v1565 = vsub.f32 %v522, %v1564
        %v1566 = vand.u32 %v1565, 4294901760
        %1567 = vmatmul.f32.gmra.mxu0 %v1566
        %v1568 = vpop.f32.mrf.mxu0
        %v1569 = vadd.f32 %v1313, %v1568
        %v1570 = vand.u32 %v525, 4294901760
        %v1571 = vsub.f32 %v525, %v1570
        %v1572 = vand.u32 %v1571, 4294901760
        %1573 = vmatmul.f32.gmra.mxu0 %v1572
        %v1574 = vpop.f32.mrf.mxu0
        %v1575 = vadd.f32 %v1318, %v1574
        %1576 = vdwg.mxu0
        %1577 = vmatpush.msra.mxu0 0.0
        %1578 = vmatpush.msra.mxu0 0.0
        %1579 = vmatpush.msra.mxu0 0.0
        %1580 = vmatpush.msra.mxu0 0.0
        %v1581 = vand.u32 %v411, 4294901760
        %v1582 = vsub.f32 %v411, %v1581
        %v1583 = vand.u32 %v1582, 4294901760
        %1584 = vmatpush.msra.mxu0 %v1583
        %v1585 = vand.u32 %v410, 4294901760
        %v1586 = vsub.f32 %v410, %v1585
        %v1587 = vand.u32 %v1586, 4294901760
        %1588 = vmatpush.msra.mxu0 %v1587
        %v1589 = vand.u32 %v409, 4294901760
        %v1590 = vsub.f32 %v409, %v1589
        %v1591 = vand.u32 %v1590, 4294901760
        %1592 = vmatpush.msra.mxu0 %v1591
        %v1593 = vand.u32 %v408, 4294901760
        %v1594 = vsub.f32 %v408, %v1593
        %v1595 = vand.u32 %v1594, 4294901760
        %1596 = vmatpush.msra.mxu0 %v1595
        %v1597 = vand.u32 %v407, 4294901760
        %v1598 = vsub.f32 %v407, %v1597
        %v1599 = vand.u32 %v1598, 4294901760
        %1600 = vmatpush.msra.mxu0 %v1599
        %v1601 = vand.u32 %v406, 4294901760
        %v1602 = vsub.f32 %v406, %v1601
        %v1603 = vand.u32 %v1602, 4294901760
        %1604 = vmatpush.msra.mxu0 %v1603
        %v1605 = vand.u32 %v405, 4294901760
        %v1606 = vsub.f32 %v405, %v1605
        %v1607 = vand.u32 %v1606, 4294901760
        %1608 = vmatpush.msra.mxu0 %v1607
        %v1609 = vand.u32 %v404, 4294901760
        %v1610 = vsub.f32 %v404, %v1609
        %v1611 = vand.u32 %v1610, 4294901760
        %1612 = vmatpush.msra.mxu0 %v1611
        %v1613 = vand.u32 %v403, 4294901760
        %v1614 = vsub.f32 %v403, %v1613
        %v1615 = vand.u32 %v1614, 4294901760
        %1616 = vmatpush.msra.mxu0 %v1615
        %v1617 = vand.u32 %v402, 4294901760
        %v1618 = vsub.f32 %v402, %v1617
        %v1619 = vand.u32 %v1618, 4294901760
        %1620 = vmatpush.msra.mxu0 %v1619
        %v1621 = vand.u32 %v401, 4294901760
        %v1622 = vsub.f32 %v401, %v1621
        %v1623 = vand.u32 %v1622, 4294901760
        %1624 = vmatpush.msra.mxu0 %v1623
        %v1625 = vand.u32 %v400, 4294901760
        %v1626 = vsub.f32 %v400, %v1625
        %v1627 = vand.u32 %v1626, 4294901760
        %1628 = vmatpush.msra.mxu0 %v1627
        %v1629 = vand.u32 %v414, 4294901760
        %1630 = vmatmul.f32.gmra.mxu0 %v1629
        %v1631 = vpop.f32.mrf.mxu0
        %v1632 = vadd.f32 %v1353, %v1631
        %v1633 = vand.u32 %v417, 4294901760
        %1634 = vmatmul.f32.gmra.mxu0 %v1633
        %v1635 = vpop.f32.mrf.mxu0
        %v1636 = vadd.f32 %v1359, %v1635
        %v1637 = vand.u32 %v420, 4294901760
        %1638 = vmatmul.f32.gmra.mxu0 %v1637
        %v1639 = vpop.f32.mrf.mxu0
        %v1640 = vadd.f32 %v1365, %v1639
        %v1641 = vand.u32 %v423, 4294901760
        %1642 = vmatmul.f32.gmra.mxu0 %v1641
        %v1643 = vpop.f32.mrf.mxu0
        %v1644 = vadd.f32 %v1371, %v1643
        %v1645 = vand.u32 %v426, 4294901760
        %1646 = vmatmul.f32.gmra.mxu0 %v1645
        %v1647 = vpop.f32.mrf.mxu0
        %v1648 = vadd.f32 %v1377, %v1647
        %v1649 = vand.u32 %v429, 4294901760
        %1650 = vmatmul.f32.gmra.mxu0 %v1649
        %v1651 = vpop.f32.mrf.mxu0
        %v1652 = vadd.f32 %v1383, %v1651
        %v1653 = vand.u32 %v432, 4294901760
        %1654 = vmatmul.f32.gmra.mxu0 %v1653
        %v1655 = vpop.f32.mrf.mxu0
        %v1656 = vadd.f32 %v1389, %v1655
        %v1657 = vand.u32 %v435, 4294901760
        %1658 = vmatmul.f32.gmra.mxu0 %v1657
        %v1659 = vpop.f32.mrf.mxu0
        %v1660 = vadd.f32 %v1395, %v1659
        %v1661 = vand.u32 %v438, 4294901760
        %1662 = vmatmul.f32.gmra.mxu0 %v1661
        %v1663 = vpop.f32.mrf.mxu0
        %v1664 = vadd.f32 %v1401, %v1663
        %v1665 = vand.u32 %v441, 4294901760
        %1666 = vmatmul.f32.gmra.mxu0 %v1665
        %v1667 = vpop.f32.mrf.mxu0
        %v1668 = vadd.f32 %v1407, %v1667
        %v1669 = vand.u32 %v444, 4294901760
        %1670 = vmatmul.f32.gmra.mxu0 %v1669
        %v1671 = vpop.f32.mrf.mxu0
        %v1672 = vadd.f32 %v1413, %v1671
        %v1673 = vand.u32 %v447, 4294901760
        %1674 = vmatmul.f32.gmra.mxu0 %v1673
        %v1675 = vpop.f32.mrf.mxu0
        %v1676 = vadd.f32 %v1419, %v1675
        %v1677 = vand.u32 %v450, 4294901760
        %1678 = vmatmul.f32.gmra.mxu0 %v1677
        %v1679 = vpop.f32.mrf.mxu0
        %v1680 = vadd.f32 %v1425, %v1679
        %v1681 = vand.u32 %v453, 4294901760
        %1682 = vmatmul.f32.gmra.mxu0 %v1681
        %v1683 = vpop.f32.mrf.mxu0
        %v1684 = vadd.f32 %v1431, %v1683
        %v1685 = vand.u32 %v456, 4294901760
        %1686 = vmatmul.f32.gmra.mxu0 %v1685
        %v1687 = vpop.f32.mrf.mxu0
        %v1688 = vadd.f32 %v1437, %v1687
        %v1689 = vand.u32 %v459, 4294901760
        %1690 = vmatmul.f32.gmra.mxu0 %v1689
        %v1691 = vpop.f32.mrf.mxu0
        %v1692 = vadd.f32 %v1443, %v1691
        %v1693 = vand.u32 %v462, 4294901760
        %1694 = vmatmul.f32.gmra.mxu0 %v1693
        %v1695 = vpop.f32.mrf.mxu0
        %v1696 = vadd.f32 %v1449, %v1695
        %v1697 = vand.u32 %v465, 4294901760
        %1698 = vmatmul.f32.gmra.mxu0 %v1697
        %v1699 = vpop.f32.mrf.mxu0
        %v1700 = vadd.f32 %v1455, %v1699
        %v1701 = vand.u32 %v468, 4294901760
        %1702 = vmatmul.f32.gmra.mxu0 %v1701
        %v1703 = vpop.f32.mrf.mxu0
        %v1704 = vadd.f32 %v1461, %v1703
        %v1705 = vand.u32 %v471, 4294901760
        %1706 = vmatmul.f32.gmra.mxu0 %v1705
        %v1707 = vpop.f32.mrf.mxu0
        %v1708 = vadd.f32 %v1467, %v1707
        %v1709 = vand.u32 %v474, 4294901760
        %1710 = vmatmul.f32.gmra.mxu0 %v1709
        %v1711 = vpop.f32.mrf.mxu0
        %v1712 = vadd.f32 %v1473, %v1711
        %v1713 = vand.u32 %v477, 4294901760
        %1714 = vmatmul.f32.gmra.mxu0 %v1713
        %v1715 = vpop.f32.mrf.mxu0
        %v1716 = vadd.f32 %v1479, %v1715
        %v1717 = vand.u32 %v480, 4294901760
        %1718 = vmatmul.f32.gmra.mxu0 %v1717
        %v1719 = vpop.f32.mrf.mxu0
        %v1720 = vadd.f32 %v1485, %v1719
        %v1721 = vand.u32 %v483, 4294901760
        %1722 = vmatmul.f32.gmra.mxu0 %v1721
        %v1723 = vpop.f32.mrf.mxu0
        %v1724 = vadd.f32 %v1491, %v1723
        %v1725 = vand.u32 %v486, 4294901760
        %1726 = vmatmul.f32.gmra.mxu0 %v1725
        %v1727 = vpop.f32.mrf.mxu0
        %v1728 = vadd.f32 %v1497, %v1727
        %v1729 = vand.u32 %v489, 4294901760
        %1730 = vmatmul.f32.gmra.mxu0 %v1729
        %v1731 = vpop.f32.mrf.mxu0
        %v1732 = vadd.f32 %v1503, %v1731
        %v1733 = vand.u32 %v492, 4294901760
        %1734 = vmatmul.f32.gmra.mxu0 %v1733
        %v1735 = vpop.f32.mrf.mxu0
        %v1736 = vadd.f32 %v1509, %v1735
        %v1737 = vand.u32 %v495, 4294901760
        %1738 = vmatmul.f32.gmra.mxu0 %v1737
        %v1739 = vpop.f32.mrf.mxu0
        %v1740 = vadd.f32 %v1515, %v1739
        %v1741 = vand.u32 %v498, 4294901760
        %1742 = vmatmul.f32.gmra.mxu0 %v1741
        %v1743 = vpop.f32.mrf.mxu0
        %v1744 = vadd.f32 %v1521, %v1743
        %v1745 = vand.u32 %v501, 4294901760
        %1746 = vmatmul.f32.gmra.mxu0 %v1745
        %v1747 = vpop.f32.mrf.mxu0
        %v1748 = vadd.f32 %v1527, %v1747
        %v1749 = vand.u32 %v504, 4294901760
        %1750 = vmatmul.f32.gmra.mxu0 %v1749
        %v1751 = vpop.f32.mrf.mxu0
        %v1752 = vadd.f32 %v1533, %v1751
        %v1753 = vand.u32 %v507, 4294901760
        %1754 = vmatmul.f32.gmra.mxu0 %v1753
        %v1755 = vpop.f32.mrf.mxu0
        %v1756 = vadd.f32 %v1539, %v1755
        %v1757 = vand.u32 %v510, 4294901760
        %1758 = vmatmul.f32.gmra.mxu0 %v1757
        %v1759 = vpop.f32.mrf.mxu0
        %v1760 = vadd.f32 %v1545, %v1759
        %v1761 = vand.u32 %v513, 4294901760
        %1762 = vmatmul.f32.gmra.mxu0 %v1761
        %v1763 = vpop.f32.mrf.mxu0
        %v1764 = vadd.f32 %v1551, %v1763
        %v1765 = vand.u32 %v516, 4294901760
        %1766 = vmatmul.f32.gmra.mxu0 %v1765
        %v1767 = vpop.f32.mrf.mxu0
        %v1768 = vadd.f32 %v1557, %v1767
        %v1769 = vand.u32 %v519, 4294901760
        %1770 = vmatmul.f32.gmra.mxu0 %v1769
        %v1771 = vpop.f32.mrf.mxu0
        %v1772 = vadd.f32 %v1563, %v1771
        %v1773 = vand.u32 %v522, 4294901760
        %1774 = vmatmul.f32.gmra.mxu0 %v1773
        %v1775 = vpop.f32.mrf.mxu0
        %v1776 = vadd.f32 %v1569, %v1775
        %v1777 = vand.u32 %v525, 4294901760
        %1778 = vmatmul.f32.gmra.mxu0 %v1777
        %v1779 = vpop.f32.mrf.mxu0
        %v1780 = vadd.f32 %v1575, %v1779
        %1781 = vdwg.mxu0
        %1782 = vmatpush.msra.mxu0 0.0
        %1783 = vmatpush.msra.mxu0 0.0
        %1784 = vmatpush.msra.mxu0 0.0
        %1785 = vmatpush.msra.mxu0 0.0
        %v1786 = vand.u32 %v411, 4294901760
        %1787 = vmatpush.msra.mxu0 %v1786
        %v1788 = vand.u32 %v410, 4294901760
        %1789 = vmatpush.msra.mxu0 %v1788
        %v1790 = vand.u32 %v409, 4294901760
        %1791 = vmatpush.msra.mxu0 %v1790
        %v1792 = vand.u32 %v408, 4294901760
        %1793 = vmatpush.msra.mxu0 %v1792
        %v1794 = vand.u32 %v407, 4294901760
        %1795 = vmatpush.msra.mxu0 %v1794
        %v1796 = vand.u32 %v406, 4294901760
        %1797 = vmatpush.msra.mxu0 %v1796
        %v1798 = vand.u32 %v405, 4294901760
        %1799 = vmatpush.msra.mxu0 %v1798
        %v1800 = vand.u32 %v404, 4294901760
        %1801 = vmatpush.msra.mxu0 %v1800
        %v1802 = vand.u32 %v403, 4294901760
        %1803 = vmatpush.msra.mxu0 %v1802
        %v1804 = vand.u32 %v402, 4294901760
        %1805 = vmatpush.msra.mxu0 %v1804
        %v1806 = vand.u32 %v401, 4294901760
        %1807 = vmatpush.msra.mxu0 %v1806
        %v1808 = vand.u32 %v400, 4294901760
        %1809 = vmatpush.msra.mxu0 %v1808
        %v1810 = vand.u32 %v414, 4294901760
        %1811 = vmatmul.f32.gmra.mxu0 %v1810
        %v1812 = vpop.f32.mrf.mxu0
        %v1813 = vadd.f32 %v1632, %v1812
        %v1814 = vand.u32 %v417, 4294901760
        %1815 = vmatmul.f32.gmra.mxu0 %v1814
        %v1816 = vpop.f32.mrf.mxu0
        %v1817 = vadd.f32 %v1636, %v1816
        %v1818 = vand.u32 %v420, 4294901760
        %1819 = vmatmul.f32.gmra.mxu0 %v1818
        %v1820 = vpop.f32.mrf.mxu0
        %v1821 = vadd.f32 %v1640, %v1820
        %v1822 = vand.u32 %v423, 4294901760
        %1823 = vmatmul.f32.gmra.mxu0 %v1822
        %v1824 = vpop.f32.mrf.mxu0
        %v1825 = vadd.f32 %v1644, %v1824
        %v1826 = vand.u32 %v426, 4294901760
        %1827 = vmatmul.f32.gmra.mxu0 %v1826
        %v1828 = vpop.f32.mrf.mxu0
        %v1829 = vadd.f32 %v1648, %v1828
        %v1830 = vand.u32 %v429, 4294901760
        %1831 = vmatmul.f32.gmra.mxu0 %v1830
        %v1832 = vpop.f32.mrf.mxu0
        %v1833 = vadd.f32 %v1652, %v1832
        %v1834 = vand.u32 %v432, 4294901760
        %1835 = vmatmul.f32.gmra.mxu0 %v1834
        %v1836 = vpop.f32.mrf.mxu0
        %v1837 = vadd.f32 %v1656, %v1836
        %v1838 = vand.u32 %v435, 4294901760
        %1839 = vmatmul.f32.gmra.mxu0 %v1838
        %v1840 = vpop.f32.mrf.mxu0
        %v1841 = vadd.f32 %v1660, %v1840
        %v1842 = vand.u32 %v438, 4294901760
        %1843 = vmatmul.f32.gmra.mxu0 %v1842
        %v1844 = vpop.f32.mrf.mxu0
        %v1845 = vadd.f32 %v1664, %v1844
        %v1846 = vand.u32 %v441, 4294901760
        %1847 = vmatmul.f32.gmra.mxu0 %v1846
        %v1848 = vpop.f32.mrf.mxu0
        %v1849 = vadd.f32 %v1668, %v1848
        %v1850 = vand.u32 %v444, 4294901760
        %1851 = vmatmul.f32.gmra.mxu0 %v1850
        %v1852 = vpop.f32.mrf.mxu0
        %v1853 = vadd.f32 %v1672, %v1852
        %v1854 = vand.u32 %v447, 4294901760
        %1855 = vmatmul.f32.gmra.mxu0 %v1854
        %v1856 = vpop.f32.mrf.mxu0
        %v1857 = vadd.f32 %v1676, %v1856
        %v1858 = vand.u32 %v450, 4294901760
        %1859 = vmatmul.f32.gmra.mxu0 %v1858
        %v1860 = vpop.f32.mrf.mxu0
        %v1861 = vadd.f32 %v1680, %v1860
        %v1862 = vand.u32 %v453, 4294901760
        %1863 = vmatmul.f32.gmra.mxu0 %v1862
        %v1864 = vpop.f32.mrf.mxu0
        %v1865 = vadd.f32 %v1684, %v1864
        %v1866 = vand.u32 %v456, 4294901760
        %1867 = vmatmul.f32.gmra.mxu0 %v1866
        %v1868 = vpop.f32.mrf.mxu0
        %v1869 = vadd.f32 %v1688, %v1868
        %v1870 = vand.u32 %v459, 4294901760
        %1871 = vmatmul.f32.gmra.mxu0 %v1870
        %v1872 = vpop.f32.mrf.mxu0
        %v1873 = vadd.f32 %v1692, %v1872
        %v1874 = vand.u32 %v462, 4294901760
        %1875 = vmatmul.f32.gmra.mxu0 %v1874
        %v1876 = vpop.f32.mrf.mxu0
        %v1877 = vadd.f32 %v1696, %v1876
        %v1878 = vand.u32 %v465, 4294901760
        %1879 = vmatmul.f32.gmra.mxu0 %v1878
        %v1880 = vpop.f32.mrf.mxu0
        %v1881 = vadd.f32 %v1700, %v1880
        %v1882 = vand.u32 %v468, 4294901760
        %1883 = vmatmul.f32.gmra.mxu0 %v1882
        %v1884 = vpop.f32.mrf.mxu0
        %v1885 = vadd.f32 %v1704, %v1884
        %v1886 = vand.u32 %v471, 4294901760
        %1887 = vmatmul.f32.gmra.mxu0 %v1886
        %v1888 = vpop.f32.mrf.mxu0
        %v1889 = vadd.f32 %v1708, %v1888
        %v1890 = vand.u32 %v474, 4294901760
        %1891 = vmatmul.f32.gmra.mxu0 %v1890
        %v1892 = vpop.f32.mrf.mxu0
        %v1893 = vadd.f32 %v1712, %v1892
        %v1894 = vand.u32 %v477, 4294901760
        %1895 = vmatmul.f32.gmra.mxu0 %v1894
        %v1896 = vpop.f32.mrf.mxu0
        %v1897 = vadd.f32 %v1716, %v1896
        %v1898 = vand.u32 %v480, 4294901760
        %1899 = vmatmul.f32.gmra.mxu0 %v1898
        %v1900 = vpop.f32.mrf.mxu0
        %v1901 = vadd.f32 %v1720, %v1900
        %v1902 = vand.u32 %v483, 4294901760
        %1903 = vmatmul.f32.gmra.mxu0 %v1902
        %v1904 = vpop.f32.mrf.mxu0
        %v1905 = vadd.f32 %v1724, %v1904
        %v1906 = vand.u32 %v486, 4294901760
        %1907 = vmatmul.f32.gmra.mxu0 %v1906
        %v1908 = vpop.f32.mrf.mxu0
        %v1909 = vadd.f32 %v1728, %v1908
        %v1910 = vand.u32 %v489, 4294901760
        %1911 = vmatmul.f32.gmra.mxu0 %v1910
        %v1912 = vpop.f32.mrf.mxu0
        %v1913 = vadd.f32 %v1732, %v1912
        %v1914 = vand.u32 %v492, 4294901760
        %1915 = vmatmul.f32.gmra.mxu0 %v1914
        %v1916 = vpop.f32.mrf.mxu0
        %v1917 = vadd.f32 %v1736, %v1916
        %v1918 = vand.u32 %v495, 4294901760
        %1919 = vmatmul.f32.gmra.mxu0 %v1918
        %v1920 = vpop.f32.mrf.mxu0
        %v1921 = vadd.f32 %v1740, %v1920
        %v1922 = vand.u32 %v498, 4294901760
        %1923 = vmatmul.f32.gmra.mxu0 %v1922
        %v1924 = vpop.f32.mrf.mxu0
        %v1925 = vadd.f32 %v1744, %v1924
        %v1926 = vand.u32 %v501, 4294901760
        %1927 = vmatmul.f32.gmra.mxu0 %v1926
        %v1928 = vpop.f32.mrf.mxu0
        %v1929 = vadd.f32 %v1748, %v1928
        %v1930 = vand.u32 %v504, 4294901760
        %1931 = vmatmul.f32.gmra.mxu0 %v1930
        %v1932 = vpop.f32.mrf.mxu0
        %v1933 = vadd.f32 %v1752, %v1932
        %v1934 = vand.u32 %v507, 4294901760
        %1935 = vmatmul.f32.gmra.mxu0 %v1934
        %v1936 = vpop.f32.mrf.mxu0
        %v1937 = vadd.f32 %v1756, %v1936
        %v1938 = vand.u32 %v510, 4294901760
        %1939 = vmatmul.f32.gmra.mxu0 %v1938
        %v1940 = vpop.f32.mrf.mxu0
        %v1941 = vadd.f32 %v1760, %v1940
        %v1942 = vand.u32 %v513, 4294901760
        %1943 = vmatmul.f32.gmra.mxu0 %v1942
        %v1944 = vpop.f32.mrf.mxu0
        %v1945 = vadd.f32 %v1764, %v1944
        %v1946 = vand.u32 %v516, 4294901760
        %1947 = vmatmul.f32.gmra.mxu0 %v1946
        %v1948 = vpop.f32.mrf.mxu0
        %v1949 = vadd.f32 %v1768, %v1948
        %v1950 = vand.u32 %v519, 4294901760
        %1951 = vmatmul.f32.gmra.mxu0 %v1950
        %v1952 = vpop.f32.mrf.mxu0
        %v1953 = vadd.f32 %v1772, %v1952
        %v1954 = vand.u32 %v522, 4294901760
        %1955 = vmatmul.f32.gmra.mxu0 %v1954
        %v1956 = vpop.f32.mrf.mxu0
        %v1957 = vadd.f32 %v1776, %v1956
        %v1958 = vand.u32 %v525, 4294901760
        %1959 = vmatmul.f32.gmra.mxu0 %v1958
        %v1960 = vpop.f32.mrf.mxu0
        %v1961 = vadd.f32 %v1780, %v1960
        %1962 = vdwg.mxu0
        %v1963 = vadd.f32 %v324, %v1813
        %v1964 = vadd.f32 %v325, %v1817
        %v1965 = vadd.f32 %v326, %v1821
        %v1966 = vadd.f32 %v327, %v1825
        %v1967 = vadd.f32 %v328, %v1829
        %v1968 = vadd.f32 %v329, %v1833
        %v1969 = vadd.f32 %v330, %v1837
        %v1970 = vadd.f32 %v331, %v1841
        %v1971 = vadd.f32 %v332, %v1845
        %v1972 = vadd.f32 %v333, %v1849
        %v1973 = vadd.f32 %v334, %v1853
        %v1974 = vadd.f32 %v335, %v1857
        %v1975 = vadd.f32 %v336, %v1861
        %v1976 = vadd.f32 %v337, %v1865
        %v1977 = vadd.f32 %v338, %v1869
        %v1978 = vadd.f32 %v339, %v1873
        %v1979 = vadd.f32 %v340, %v1877
        %v1980 = vadd.f32 %v341, %v1881
        %v1981 = vadd.f32 %v342, %v1885
        %v1982 = vadd.f32 %v343, %v1889
        %v1983 = vadd.f32 %v344, %v1893
        %v1984 = vadd.f32 %v345, %v1897
        %v1985 = vadd.f32 %v346, %v1901
        %v1986 = vadd.f32 %v347, %v1905
        %v1987 = vadd.f32 %v348, %v1909
        %v1988 = vadd.f32 %v349, %v1913
        %v1989 = vadd.f32 %v350, %v1917
        %v1990 = vadd.f32 %v351, %v1921
        %v1991 = vadd.f32 %v352, %v1925
        %v1992 = vadd.f32 %v353, %v1929
        %v1993 = vadd.f32 %v354, %v1933
        %v1994 = vadd.f32 %v355, %v1937
        %v1995 = vadd.f32 %v356, %v1941
        %v1996 = vadd.f32 %v357, %v1945
        %v1997 = vadd.f32 %v358, %v1949
        %v1998 = vadd.f32 %v359, %v1953
        %v1999 = vadd.f32 %v360, %v1957
        %v2000 = vadd.f32 %v361, %v1961
        %2001 = vst [vmem:[#allocation2] sm:$0xff] %v1963
        %2002 = vst [vmem:[#allocation2 + $0x8] sm:$0xff] %v1964
        %2003 = vst [vmem:[#allocation2 + $0x10] sm:$0xff] %v1965
        %2004 = vst [vmem:[#allocation2 + $0x18] sm:$0xff] %v1966
        %2005 = vst [vmem:[#allocation2 + $0x20] sm:$0xff] %v1967
        %2006 = vst [vmem:[#allocation2 + $0x28] sm:$0xff] %v1968
        %2007 = vst [vmem:[#allocation2 + $0x30] sm:$0xff] %v1969
        %2008 = vst [vmem:[#allocation2 + $0x38] sm:$0xff] %v1970
        %2009 = vst [vmem:[#allocation2 + $0x40] sm:$0xff] %v1971
        %2010 = vst [vmem:[#allocation2 + $0x48] sm:$0xff] %v1972
        %2011 = vst [vmem:[#allocation2 + $0x50] sm:$0xff] %v1973
        %2012 = vst [vmem:[#allocation2 + $0x58] sm:$0xff] %v1974
        %2013 = vst [vmem:[#allocation2 + $0x60] sm:$0xff] %v1975
        %2014 = vst [vmem:[#allocation2 + $0x68] sm:$0xff] %v1976
        %2015 = vst [vmem:[#allocation2 + $0x70] sm:$0xff] %v1977
        %2016 = vst [vmem:[#allocation2 + $0x78] sm:$0xff] %v1978
        %2017 = vst [vmem:[#allocation2 + $0x80] sm:$0xff] %v1979
        %2018 = vst [vmem:[#allocation2 + $0x88] sm:$0xff] %v1980
        %2019 = vst [vmem:[#allocation2 + $0x90] sm:$0xff] %v1981
        %2020 = vst [vmem:[#allocation2 + $0x98] sm:$0xff] %v1982
        %2021 = vst [vmem:[#allocation2 + $0xa0] sm:$0xff] %v1983
        %2022 = vst [vmem:[#allocation2 + $0xa8] sm:$0xff] %v1984
        %2023 = vst [vmem:[#allocation2 + $0xb0] sm:$0xff] %v1985
        %2024 = vst [vmem:[#allocation2 + $0xb8] sm:$0xff] %v1986
        %2025 = vst [vmem:[#allocation2 + $0xc0] sm:$0xff] %v1987
        %2026 = vst [vmem:[#allocation2 + $0xc8] sm:$0xff] %v1988
        %2027 = vst [vmem:[#allocation2 + $0xd0] sm:$0xff] %v1989
        %2028 = vst [vmem:[#allocation2 + $0xd8] sm:$0xff] %v1990
        %2029 = vst [vmem:[#allocation2 + $0xe0] sm:$0xff] %v1991
        %2030 = vst [vmem:[#allocation2 + $0xe8] sm:$0xff] %v1992
        %2031 = vst [vmem:[#allocation2 + $0xf0] sm:$0xff] %v1993
        %2032 = vst [vmem:[#allocation2 + $0xf8] sm:$0xff] %v1994
        %2033 = vst [vmem:[#allocation2 + $0x100] sm:$0xff] %v1995
        %2034 = vst [vmem:[#allocation2 + $0x108] sm:$0xff] %v1996
        %2035 = vst [vmem:[#allocation2 + $0x110] sm:$0xff] %v1997
        %2036 = vst [vmem:[#allocation2 + $0x118] sm:$0xff] %v1998
        %2037 = vst [vmem:[#allocation2 + $0x120] sm:$0xff] %v1999
        %2038 = vst [vmem:[#allocation2 + $0x128] sm:$0xff] %v2000
        // Predicated region
        $region71: #{tpu_custom_call.1} parent=61 // pred_check
          %p2039 = pneg %p282
        $region72: #{tpu_custom_call.1} parent=61 // pred_check_branch
          %2041 = sbr.rel (%p2039) target = $region74
        $region73: #{tpu_custom_call.1} parent=61 // pred_region
          %v2042 = vld [vmem:[#allocation2] sm:$0xff]
          %v2043 = vld [vmem:[#allocation2 + $0x8] sm:$0xff]
          %v2044 = vld [vmem:[#allocation2 + $0x10] sm:$0xff]
          %v2045 = vld [vmem:[#allocation2 + $0x18] sm:$0xff]
          %v2046 = vld [vmem:[#allocation2 + $0x20] sm:$0xff]
          %v2047 = vld [vmem:[#allocation2 + $0x28] sm:$0xff]
          %v2048 = vld [vmem:[#allocation2 + $0x30] sm:$0xff]
          %v2049 = vld [vmem:[#allocation2 + $0x38] sm:$0xff]
          %v2050 = vld [vmem:[#allocation2 + $0x40] sm:$0xff]
          %v2051 = vld [vmem:[#allocation2 + $0x48] sm:$0xff]
          %v2052 = vld [vmem:[#allocation2 + $0x50] sm:$0xff]
          %v2053 = vld [vmem:[#allocation2 + $0x58] sm:$0xff]
          %v2054 = vld [vmem:[#allocation2 + $0x60] sm:$0xff]
          %v2055 = vld [vmem:[#allocation2 + $0x68] sm:$0xff]
          %v2056 = vld [vmem:[#allocation2 + $0x70] sm:$0xff]
          %v2057 = vld [vmem:[#allocation2 + $0x78] sm:$0xff]
          %v2058 = vld [vmem:[#allocation2 + $0x80] sm:$0xff]
          %v2059 = vld [vmem:[#allocation2 + $0x88] sm:$0xff]
          %v2060 = vld [vmem:[#allocation2 + $0x90] sm:$0xff]
          %v2061 = vld [vmem:[#allocation2 + $0x98] sm:$0xff]
          %v2062 = vld [vmem:[#allocation2 + $0xa0] sm:$0xff]
          %v2063 = vld [vmem:[#allocation2 + $0xa8] sm:$0xff]
          %v2064 = vld [vmem:[#allocation2 + $0xb0] sm:$0xff]
          %v2065 = vld [vmem:[#allocation2 + $0xb8] sm:$0xff]
          %v2066 = vld [vmem:[#allocation2 + $0xc0] sm:$0xff]
          %v2067 = vld [vmem:[#allocation2 + $0xc8] sm:$0xff]
          %v2068 = vld [vmem:[#allocation2 + $0xd0] sm:$0xff]
          %v2069 = vld [vmem:[#allocation2 + $0xd8] sm:$0xff]
          %v2070 = vld [vmem:[#allocation2 + $0xe0] sm:$0xff]
          %v2071 = vld [vmem:[#allocation2 + $0xe8] sm:$0xff]
          %v2072 = vld [vmem:[#allocation2 + $0xf0] sm:$0xff]
          %v2073 = vld [vmem:[#allocation2 + $0xf8] sm:$0xff]
          %v2074 = vld [vmem:[#allocation2 + $0x100] sm:$0xff]
          %v2075 = vld [vmem:[#allocation2 + $0x108] sm:$0xff]
          %v2076 = vld [vmem:[#allocation2 + $0x110] sm:$0xff]
          %v2077 = vld [vmem:[#allocation2 + $0x118] sm:$0xff]
          %v2078 = vld [vmem:[#allocation2 + $0x120] sm:$0xff]
          %v2079 = vld [vmem:[#allocation2 + $0x128] sm:$0xff]
          %2080 = vst [vmem:[%s270] sm:$0xff] %v2042
          %2081 = vst [vmem:[%s270 + $0x8] sm:$0xff] %v2043
          %2082 = vst [vmem:[%s270 + $0x10] sm:$0xff] %v2044
          %2083 = vst [vmem:[%s270 + $0x18] sm:$0xff] %v2045
          %2084 = vst [vmem:[%s270 + $0x20] sm:$0xff] %v2046
          %2085 = vst [vmem:[%s270 + $0x28] sm:$0xff] %v2047
          %2086 = vst [vmem:[%s270 + $0x30] sm:$0xff] %v2048
          %2087 = vst [vmem:[%s270 + $0x38] sm:$0xff] %v2049
          %2088 = vst [vmem:[%s270 + $0x40] sm:$0xff] %v2050
          %2089 = vst [vmem:[%s270 + $0x48] sm:$0xff] %v2051
          %2090 = vst [vmem:[%s270 + $0x50] sm:$0xff] %v2052
          %2091 = vst [vmem:[%s270 + $0x58] sm:$0xff] %v2053
          %2092 = vst [vmem:[%s270 + $0x60] sm:$0xff] %v2054
          %2093 = vst [vmem:[%s270 + $0x68] sm:$0xff] %v2055
          %2094 = vst [vmem:[%s270 + $0x70] sm:$0xff] %v2056
          %2095 = vst [vmem:[%s270 + $0x78] sm:$0xff] %v2057
          %2096 = vst [vmem:[%s270 + $0x80] sm:$0xff] %v2058
          %2097 = vst [vmem:[%s270 + $0x88] sm:$0xff] %v2059
          %2098 = vst [vmem:[%s270 + $0x90] sm:$0xff] %v2060
          %2099 = vst [vmem:[%s270 + $0x98] sm:$0xff] %v2061
          %2100 = vst [vmem:[%s270 + $0xa0] sm:$0xff] %v2062
          %2101 = vst [vmem:[%s270 + $0xa8] sm:$0xff] %v2063
          %2102 = vst [vmem:[%s270 + $0xb0] sm:$0xff] %v2064
          %2103 = vst [vmem:[%s270 + $0xb8] sm:$0xff] %v2065
          %2104 = vst [vmem:[%s270 + $0xc0] sm:$0xff] %v2066
          %2105 = vst [vmem:[%s270 + $0xc8] sm:$0xff] %v2067
          %2106 = vst [vmem:[%s270 + $0xd0] sm:$0xff] %v2068
          %2107 = vst [vmem:[%s270 + $0xd8] sm:$0xff] %v2069
          %2108 = vst [vmem:[%s270 + $0xe0] sm:$0xff] %v2070
          %2109 = vst [vmem:[%s270 + $0xe8] sm:$0xff] %v2071
          %2110 = vst [vmem:[%s270 + $0xf0] sm:$0xff] %v2072
          %2111 = vst [vmem:[%s270 + $0xf8] sm:$0xff] %v2073
          %2112 = vst [vmem:[%s270 + $0x100] sm:$0xff] %v2074
          %2113 = vst [vmem:[%s270 + $0x108] sm:$0xff] %v2075
          %2114 = vst [vmem:[%s270 + $0x110] sm:$0xff] %v2076
          %2115 = vst [vmem:[%s270 + $0x118] sm:$0xff] %v2077
          %2116 = vst [vmem:[%s270 + $0x120] sm:$0xff] %v2078
          %2117 = vst [vmem:[%s270 + $0x128] sm:$0xff] %v2079
        $region74: #{tpu_custom_call.1} parent=61 // pred_fallthru
          _
        %s2118 = sand.u32 %s101, 1
        %s2119 = scalar_lea.sflag [#allocation5], %s2118
        %s2120 = sand.u32 %s101, 1
        %s2121 = smul.addr %s2120, 304
        %s2122 = scalar_lea.vmem [#allocation4], %s2121
        // Predicated region
        $region75: #{tpu_custom_call.1} parent=61 // pred_check
          %p2123 = pneg %p111
        $region76: #{tpu_custom_call.1} parent=61 // pred_check_branch
          %2125 = sbr.rel (%p2123) target = $region78
        $region77: #{tpu_custom_call.1} parent=61 // pred_region
          %s2126 = smul.u32 38, %s21
          %2128 = vsyncadd %s2119, 0
          %s2129 = smul.addr %s2126, 3
          %s2130 = sadd.s32 %s22, %s2129
          %s2131 = smul.addr %s2130, 8
          %s2132 = scalar_lea.hbm %s2, %s2131
          %s2133 = sshll.u32 %s2122, 4
          %s2134 = int_to_ptr.vmem [resolvable:$true] %s2133
          %s2135 = sshll.u32 %s2132, 4
          %s2136 = int_to_ptr.hbm [resolvable:$true] %s2135
          %2141 = dma.vmem_to_hbm [thread:$0]  %s2134, 4864, %s2136, %s2119, 128, 384, 8
        $region78: #{tpu_custom_call.1} parent=61 // pred_fallthru
          _
      $region62: #{tpu_custom_call.1} parent=5 // pred_fallthru
        _
      %p2142 = scmp.le.s32.totalorder 2, %s11
      // Predicated region
      $region79: #{tpu_custom_call.1} parent=5 // pred_check
        %p2143 = pneg %p2142
      $region80: #{tpu_custom_call.1} parent=5 // pred_check_branch
        %2145 = sbr.rel (%p2143) target = $region82
      $region81: #{tpu_custom_call.1} parent=5 // pred_region
        %s2146 = ssub.s32 %s11, 2
        // Predicated region
        $region83: #{tpu_custom_call.1} parent=81 // pred_check
          %p2147 = pneg %p117
        $region84: #{tpu_custom_call.1} parent=81 // pred_check_branch
          %2149 = sbr.rel (%p2147) target = $region86
        $region85: #{tpu_custom_call.1} parent=81 // pred_region
          %s2150 = sand.u32 %s102, 1
          %s2151 = scalar_lea.sflag [#allocation5], %s2150
          %s2152 = sand.u32 %s102, 1
          %s2153 = smul.addr %s2152, 304
          %s2154 = scalar_lea.vmem [#allocation4], %s2153
          %2156 = dma.done %s2151, 4864
        $region86: #{tpu_custom_call.1} parent=81 // pred_fallthru
          _
      $region82: #{tpu_custom_call.1} parent=5 // pred_fallthru
        _
    $region6: #{tpu_custom_call.1} parent=1 // loop_footer
      %s15 = sadd.s32 1, %s11
    $region7: #{tpu_custom_call.1} parent=1 // loop_footer_branch
      %10 = sbr.rel target = $region3
    $region8: #{tpu_custom_call.1} parent=1 // loop_exit
      _
    %2157 = vsyncpa [#allocation5], 1
    %s2158 = scalar_lea.sflag [#allocation5], 1
    %2159 = vsyncpa %s2158, 1

</llo_original>
